<compile_context>
chip_gen: v7x
topology: tpu7x:2x2x1
jax: 0.10.0
libtpu: 0.0.40
codegen_flags: <defaults>
</compile_context>

<pallas_src>
import functools

import jax
import jax.numpy as jnp
from jax.experimental import pallas as pl
from jax.experimental.pallas import tpu as pltpu

_EPS = 1e-6                                  # nn.PairwiseDistance default eps
_TILE_BYTES_PER_INPUT = 2 * 1024 * 1024      # per-input per-step VMEM tile target
_VMEM_LIMIT_BYTES = 40 * 1024 * 1024         # safe on v7x (64 MiB/TC); ample on v5e/v6e
_OUT_ROWS = 8                                # per-core lane-dense output block rows


def _contrastive_loss_kernel(margins_ref, seg_ref, x_ref, p_ref, n_ref,
                             out_ref, acc_ref, *,
                             rows_total, block_rows, group, tiles_per_core,
                             mask_needed):
    c = pl.program_id(0)          # core-split axis ("parallel")
    i = pl.program_id(1)          # batch-tile axis ("arbitrary", accumulator-resident)

    @pl.when(i == 0)
    def _init():
        acc_ref[...] = jnp.zeros_like(acc_ref)

    m1 = margins_ref[0]
    m2 = margins_ref[1]

    # Upcast once (no-op for f32 inputs); all arithmetic stays in f32.
    x = x_ref[...].astype(jnp.float32)
    p = p_ref[...].astype(jnp.float32)
    n = n_ref[...].astype(jnp.float32)

    d_pos = x - p + _EPS
    d_neg = x - n + _EPS
    sq_pos = d_pos * d_pos
    sq_neg = d_neg * d_neg

    if group == 1:
        # Plain layout: reduce over the full (lane) feature dim.
        pos_sq = jnp.sum(sq_pos, axis=-1, keepdims=True)
        neg_sq = jnp.sum(sq_neg, axis=-1, keepdims=True)
    else:
        # Lane-dense layout: segmented per-original-row reduce via a 0/1
        # block-diagonal matmul on the otherwise-idle MXU.  (tb, 128) @ (128, G)
        seg = seg_ref[...]
        pos_sq = jax.lax.dot(sq_pos, seg,
                             precision=jax.lax.Precision.HIGHEST,
                             preferred_element_type=jnp.float32)
        neg_sq = jax.lax.dot(sq_neg, seg,
                             precision=jax.lax.Precision.HIGHEST,
                             preferred_element_type=jnp.float32)

    pos_dist = jnp.sqrt(pos_sq)
    neg_dist = jnp.sqrt(neg_sq)

    hinge = jnp.maximum(pos_dist - m1, 0.0) + jnp.maximum(m2 - neg_dist, 0.0)

    def _accumulate(h):
        # rows -> 1 fold only (VPU adds + one sublane reduce); cross-lane reduce
        # and the 1/B scale are deferred to finalize / the wrapper.
        acc_ref[...] += jnp.sum(h, axis=0, keepdims=True)

    tile_idx = c * tiles_per_core + i
    if not mask_needed:
        _accumulate(hinge)
    else:
        tile_start = tile_idx * block_rows
        overruns = tile_start + block_rows > rows_total

        @pl.when(jnp.logical_not(overruns))
        def _full_tile():
            _accumulate(hinge)

        @pl.when(overruns)
        def _partial_tile():
            # Mask AFTER the nonlinearities: garbage in padded rows is discarded.
            row = tile_start + jax.lax.broadcasted_iota(jnp.int32, hinge.shape, 0)
            _accumulate(jnp.where(row < rows_total, hinge, 0.0))

    @pl.when(i == pl.num_programs(1) - 1)
    def _finalize():
        # One cross-lane reduce per core for the whole kernel; broadcast into a
        # lane-dense (8, 128) output block (unmasked vst, written exactly once).
        total = jnp.sum(acc_ref[...]).reshape(1, 1)
        out_ref[...] = jnp.broadcast_to(total, out_ref.shape)


def _pack_lane_dense(B, D):
    """(rows, lanes, group): lane-dense repack metadata for narrow feature dims."""
    if D < 128 and 128 % D == 0 and (B * D) % 128 == 0:
        return (B * D) // 128, 128, 128 // D
    return B, D, 1


def contrastive_loss(out_self, pos_out, neg_out, margin1, margin2, block_rows=None):
    assert out_self.shape == pos_out.shape == neg_out.shape
    assert out_self.dtype == pos_out.dtype == neg_out.dtype
    B, D = out_self.shape
    itemsize = jnp.dtype(out_self.dtype).itemsize

    rows, lanes, group = _pack_lane_dense(B, D)
    if group > 1:
        # Contiguous row-major reshape: free, no data movement.
        x = out_self.reshape(rows, lanes)
        p = pos_out.reshape(rows, lanes)
        n = neg_out.reshape(rows, lanes)
    else:
        x, p, n = out_self, pos_out, neg_out

    # Sublane alignment for the tile row count: f32 -> 8, bf16/f16 -> 16, 8-bit -> 32.
    sub = max(8, 32 // itemsize)

    if block_rows is None:
        tb = max(1, _TILE_BYTES_PER_INPUT // (lanes * itemsize))
    else:
        tb = max(1, int(block_rows))
    if tb >= rows:
        tb = rows                              # single full-array block: always legal
    else:
        tb = max(sub, (tb // sub) * sub)

    n_blocks = -(-rows // tb)
    num_splits = 2 if n_blocks >= 2 else 1     # v7x: shard tiles across both TCs
    tiles_per_core = -(-n_blocks // num_splits)
    mask_needed = (rows % tb != 0) or (num_splits * tiles_per_core != n_blocks)

    # Static 0/1 block-diagonal segment-sum matrix (lanes, group).
    if group == 1:
        seg = jnp.ones((lanes, 1), jnp.float32)          # unused by the kernel
    else:
        lane_id = jnp.arange(lanes, dtype=jnp.int32)[:, None]
        col_id = jnp.arange(group, dtype=jnp.int32)[None, :]
        seg = (lane_id // D == col_id).astype(jnp.float32)

    margins = jnp.asarray([margin1, margin2], dtype=jnp.float32)

    kernel = functools.partial(
        _contrastive_loss_kernel,
        rows_total=rows, block_rows=tb, group=group,
        tiles_per_core=tiles_per_core, mask_needed=mask_needed)

    last_block = n_blocks - 1

    def data_map(c, i):
        # Clamp so a core's trailing (fully-masked) tile never indexes past the array.
        return (jnp.minimum(c * tiles_per_core + i, last_block), 0)

    out = pl.pallas_call(
        kernel,
        out_shape=jax.ShapeDtypeStruct((num_splits * _OUT_ROWS, 128), jnp.float32),
        grid=(num_splits, tiles_per_core),
        in_specs=[
            pl.BlockSpec(memory_space=pltpu.MemorySpace.SMEM),   # margins (2,)
            pl.BlockSpec((lanes, group), lambda c, i: (0, 0)),   # segment matrix
            pl.BlockSpec((tb, lanes), data_map),                 # out_self
            pl.BlockSpec((tb, lanes), data_map),                 # pos_out
            pl.BlockSpec((tb, lanes), data_map),                 # neg_out
        ],
        out_specs=pl.BlockSpec((_OUT_ROWS, 128), lambda c, i: (c, 0)),
        scratch_shapes=[pltpu.VMEM((1, group), jnp.float32)],
        compiler_params=pltpu.CompilerParams(
            dimension_semantics=("parallel", "arbitrary"),
            vmem_limit_bytes=_VMEM_LIMIT_BYTES,
        ),
    )(margins, seg, x, p, n)

    # Each core broadcast-wrote its partial hinge sum into its own (8, 128) block.
    return jnp.sum(out[0::_OUT_ROWS, 0]) / B


def contrastive_loss_ref(out_self, pos_out, neg_out, margin1, margin2):
    # Pure-JAX reference mirroring the PyTorch forward, for correctness checking.
    pos_dist = jnp.linalg.norm(out_self - pos_out + _EPS, axis=-1)
    neg_dist = jnp.linalg.norm(out_self - neg_out + _EPS, axis=-1)
    return jnp.mean(
        jnp.maximum(pos_dist - margin1, 0.0) + jnp.maximum(margin2 - neg_dist, 0.0)
    )


if __name__ == "__main__":
    # Deterministic "constructor args" (module has no learned weights).
    margin1, margin2 = 0.5, 1.5

    cases = [
        # (name,                     B,  D,  dtype,        block_rows, rtol, atol)
        ("packed_single_tile",       32, 32, jnp.float32,  None,       2e-3, 2e-3),
        ("packed_two_core_masked",   40, 32, jnp.float32,  8,          2e-3, 2e-3),
        ("plain_D96_clamped_tile",   24, 96, jnp.float32,  8,          1e-5, 1e-5),
        ("packed_bf16_inputs",       32, 32, jnp.bfloat16, None,       2e-3, 2e-3),
    ]

    keys = jax.random.split(jax.random.PRNGKey(0), len(cases))
    for (name, B, D, dtype, br, rtol, atol), key in zip(cases, keys):
        k1, k2, k3 = jax.random.split(key, 3)
        a = jax.random.normal(k1, (B, D), dtype=jnp.float32).astype(dtype)
        b = jax.random.normal(k2, (B, D), dtype=jnp.float32).astype(dtype)
        c = jax.random.normal(k3, (B, D), dtype=jnp.float32).astype(dtype)

        got = jax.block_until_ready(
            contrastive_loss(a, b, c, margin1, margin2, block_rows=br))
        want = contrastive_loss_ref(a.astype(jnp.float32), b.astype(jnp.float32),
                                    c.astype(jnp.float32), margin1, margin2)
        assert jnp.allclose(got, want, rtol=rtol, atol=atol), (name, got, want)

    print("KERNEL_OK")
</pallas_src>

<mosaic_0001>
module attributes {stable_mosaic.version = 11 : i64} {
  func.func @_contrastive_loss_kernel(%arg0: i32, %arg1: i32, %arg2: memref<2xf32, #tpu.memory_space<smem>>, %arg3: memref<128x4xf32, #tpu.memory_space<vmem>>, %arg4: memref<8x128xf32, #tpu.memory_space<vmem>>, %arg5: memref<8x128xf32, #tpu.memory_space<vmem>>, %arg6: memref<8x128xf32, #tpu.memory_space<vmem>>, %arg7: memref<8x128xf32, #tpu.memory_space<vmem>>, %arg8: memref<1x4xf32, #tpu.memory_space<vmem>>) attributes {dimension_semantics = [#tpu.dimension_semantics<parallel>, #tpu.dimension_semantics<arbitrary>], iteration_bounds = array<i64: 1, 1>, scalar_prefetch = 0 : i64, scratch_operands = 1 : i64, tpu.core_type = #tpu.core_type<tc>, window_params = [{transform_indices = @transform_0, window_bounds = array<i64: 2>}, {pipeline_mode = #tpu.pipeline_mode<synchronous>, transform_indices = @transform_1, window_bounds = array<i64: 128, 4>}, {transform_indices = @transform_2, window_bounds = array<i64: 8, 128>}, {transform_indices = @transform_3, window_bounds = array<i64: 8, 128>}, {transform_indices = @transform_4, window_bounds = array<i64: 8, 128>}, {transform_indices = @transform_5, window_bounds = array<i64: 8, 128>}]} {
    %c0_i32 = arith.constant 0 : i32
    %0 = arith.cmpi eq, %arg1, %c0_i32 : i32
    %1 = arith.extui %0 : i1 to i32
    %c0_i32_0 = arith.constant 0 : i32
    %2 = arith.cmpi ne, %1, %c0_i32_0 : i32
    scf.if %2 {
      %cst_21 = arith.constant 0.000000e+00 : f32
      %38 = vector.broadcast %cst_21 : f32 to vector<1x4xf32>
      %c0_22 = arith.constant 0 : index
      %c0_23 = arith.constant 0 : index
      %39 = vector.load %arg8[%c0_22, %c0_23] : memref<1x4xf32, #tpu.memory_space<vmem>>, vector<1x4xf32>
      tpu.vector_store %arg8[%c0_22, %c0_23], %38 {strides = array<i32>} : memref<1x4xf32, #tpu.memory_space<vmem>>, vector<1x4xf32>,
    } else {
    }
    %c0 = arith.constant 0 : index
    %3 = memref.load %arg2[%c0] : memref<2xf32, #tpu.memory_space<smem>>
    %c1 = arith.constant 1 : index
    %4 = memref.load %arg2[%c1] : memref<2xf32, #tpu.memory_space<smem>>
    %c0_1 = arith.constant 0 : index
    %c0_2 = arith.constant 0 : index
    %5 = vector.load %arg4[%c0_1, %c0_2] : memref<8x128xf32, #tpu.memory_space<vmem>>, vector<8x128xf32>
    %c0_3 = arith.constant 0 : index
    %c0_4 = arith.constant 0 : index
    %6 = vector.load %arg5[%c0_3, %c0_4] : memref<8x128xf32, #tpu.memory_space<vmem>>, vector<8x128xf32>
    %c0_5 = arith.constant 0 : index
    %c0_6 = arith.constant 0 : index
    %7 = vector.load %arg6[%c0_5, %c0_6] : memref<8x128xf32, #tpu.memory_space<vmem>>, vector<8x128xf32>
    %8 = arith.subf %5, %6 : vector<8x128xf32>
    %cst = arith.constant 9.99999997E-7 : f32
    %9 = vector.broadcast %cst : f32 to vector<8x128xf32>
    %10 = arith.addf %8, %9 : vector<8x128xf32>
    %11 = arith.subf %5, %7 : vector<8x128xf32>
    %cst_7 = arith.constant 9.99999997E-7 : f32
    %12 = vector.broadcast %cst_7 : f32 to vector<8x128xf32>
    %13 = arith.addf %11, %12 : vector<8x128xf32>
    %14 = arith.mulf %10, %10 : vector<8x128xf32>
    %15 = arith.mulf %13, %13 : vector<8x128xf32>
    %c0_8 = arith.constant 0 : index
    %c0_9 = arith.constant 0 : index
    %16 = vector.load %arg3[%c0_8, %c0_9] : memref<128x4xf32, #tpu.memory_space<vmem>>, vector<128x4xf32>
    %cst_10 = arith.constant dense<0.000000e+00> : vector<8x4xf32>
    %17 = tpu.matmul %14, %16, %cst_10 {dimension_numbers = #tpu.dot_dimension_numbers<[1], [0], [0], [1], [0, 0, 1, 1], [], []>, precision = #tpu.contract_precision<fp32>} : vector<8x128xf32>, vector<128x4xf32>, vector<8x4xf32> -> vector<8x4xf32>
    %cst_11 = arith.constant dense<0.000000e+00> : vector<8x4xf32>
    %18 = tpu.matmul %15, %16, %cst_11 {dimension_numbers = #tpu.dot_dimension_numbers<[1], [0], [0], [1], [0, 0, 1, 1], [], []>, precision = #tpu.contract_precision<fp32>} : vector<8x128xf32>, vector<128x4xf32>, vector<8x4xf32> -> vector<8x4xf32>
    %19 = math.sqrt %17 : vector<8x4xf32>
    %20 = math.sqrt %18 : vector<8x4xf32>
    %21 = vector.broadcast %3 : f32 to vector<8x4xf32>
    %22 = arith.subf %19, %21 : vector<8x4xf32>
    %cst_12 = arith.constant 0.000000e+00 : f32
    %23 = vector.broadcast %cst_12 : f32 to vector<8x4xf32>
    %24 = arith.maximumf %22, %23 : vector<8x4xf32>
    %25 = vector.broadcast %4 : f32 to vector<8x4xf32>
    %26 = arith.subf %25, %20 : vector<8x4xf32>
    %cst_13 = arith.constant 0.000000e+00 : f32
    %27 = vector.broadcast %cst_13 : f32 to vector<8x4xf32>
    %28 = arith.maximumf %26, %27 : vector<8x4xf32>
    %29 = arith.addf %24, %28 : vector<8x4xf32>
    %c0_14 = arith.constant 0 : index
    %c0_15 = arith.constant 0 : index
    %30 = vector.load %arg8[%c0_14, %c0_15] : memref<1x4xf32, #tpu.memory_space<vmem>>, vector<1x4xf32>
    %cst_16 = arith.constant dense<0.000000e+00> : vector<4xf32>
    %31 = vector.multi_reduction <add>, %29, %cst_16 [0] : vector<8x4xf32> to vector<4xf32>
    %32 = vector.shape_cast %31 : vector<4xf32> to vector<1x4xf32>
    %33 = arith.addf %30, %32 : vector<1x4xf32>
    %c0_17 = arith.constant 0 : index
    %c0_18 = arith.constant 0 : index
    %34 = vector.load %arg8[%c0_17, %c0_18] : memref<1x4xf32, #tpu.memory_space<vmem>>, vector<1x4xf32>
    tpu.vector_store %arg8[%c0_17, %c0_18], %33 {strides = array<i32>} : memref<1x4xf32, #tpu.memory_space<vmem>>, vector<1x4xf32>,
    %c0_i32_19 = arith.constant 0 : i32
    %35 = arith.cmpi eq, %arg1, %c0_i32_19 : i32
    %36 = arith.extui %35 : i1 to i32
    %c0_i32_20 = arith.constant 0 : i32
    %37 = arith.cmpi ne, %36, %c0_i32_20 : i32
    scf.if %37 {
      %c0_21 = arith.constant 0 : index
      %c0_22 = arith.constant 0 : index
      %38 = vector.load %arg8[%c0_21, %c0_22] : memref<1x4xf32, #tpu.memory_space<vmem>>, vector<1x4xf32>
      %39 = vector.shape_cast %38 : vector<1x4xf32> to vector<1x1x4xf32>
      %cst_23 = arith.constant dense<0.000000e+00> : vector<1xf32>
      %40 = vector.multi_reduction <add>, %39, %cst_23 [1, 2] : vector<1x1x4xf32> to vector<1xf32>
      %41 = vector.shape_cast %40 : vector<1xf32> to vector<1x1x1xf32>
      %42 = vector.extract %41[0, 0, 0] : f32 from vector<1x1x1xf32>
      %43 = vector.broadcast %42 : f32 to vector<1x1xf32>
      %44 = vector.shape_cast %43 : vector<1x1xf32> to vector<1x1xf32>
      %45 = vector.broadcast %44 : vector<1x1xf32> to vector<8x128xf32>
      %c0_24 = arith.constant 0 : index
      %c0_25 = arith.constant 0 : index
      %46 = vector.load %arg7[%c0_24, %c0_25] : memref<8x128xf32, #tpu.memory_space<vmem>>, vector<8x128xf32>
      tpu.vector_store %arg7[%c0_24, %c0_25], %45 {strides = array<i32>} : memref<8x128xf32, #tpu.memory_space<vmem>>, vector<8x128xf32>,
    } else {
    }
    return
  }
  func.func @transform_0(%arg0: i32, %arg1: i32) -> i32 {
    %c0_i32 = arith.constant 0 : i32
    %c0_i32_0 = arith.constant 0 : i32
    return %c0_i32 : i32
  }
  func.func @transform_1(%arg0: i32, %arg1: i32) -> (i32, i32) {
    %c0_i32 = arith.constant 0 : i32
    %c0_i32_0 = arith.constant 0 : i32
    %c0_i32_1 = arith.constant 0 : i32
    return %c0_i32, %c0_i32_0 : i32, i32
  }
  func.func @transform_2(%arg0: i32, %arg1: i32) -> (i32, i32) {
    %c1_i32 = arith.constant 1 : i32
    %0 = arith.muli %arg0, %c1_i32 : i32
    %1 = arith.addi %0, %arg1 : i32
    %c0_i32 = arith.constant 0 : i32
    %2 = arith.minsi %1, %c0_i32 : i32
    %c0_i32_0 = arith.constant 0 : i32
    %c0_i32_1 = arith.constant 0 : i32
    return %2, %c0_i32_0 : i32, i32
  }
  func.func @transform_3(%arg0: i32, %arg1: i32) -> (i32, i32) {
    %c1_i32 = arith.constant 1 : i32
    %0 = arith.muli %arg0, %c1_i32 : i32
    %1 = arith.addi %0, %arg1 : i32
    %c0_i32 = arith.constant 0 : i32
    %2 = arith.minsi %1, %c0_i32 : i32
    %c0_i32_0 = arith.constant 0 : i32
    %c0_i32_1 = arith.constant 0 : i32
    return %2, %c0_i32_0 : i32, i32
  }
  func.func @transform_4(%arg0: i32, %arg1: i32) -> (i32, i32) {
    %c1_i32 = arith.constant 1 : i32
    %0 = arith.muli %arg0, %c1_i32 : i32
    %1 = arith.addi %0, %arg1 : i32
    %c0_i32 = arith.constant 0 : i32
    %2 = arith.minsi %1, %c0_i32 : i32
    %c0_i32_0 = arith.constant 0 : i32
    %c0_i32_1 = arith.constant 0 : i32
    return %2, %c0_i32_0 : i32, i32
  }
  func.func @transform_5(%arg0: i32, %arg1: i32) -> (i32, i32) {
    %c0_i32 = arith.constant 0 : i32
    %c0_i32_0 = arith.constant 0 : i32
    return %arg0, %c0_i32 : i32, i32
  }
}

</mosaic_0001>

<llo_original>
// kernel: tpu_custom_call.1
$region0: #{tpu_custom_call.1}
  #allocation0 [shape = 'u32[]', space=smem, size = 0x4, offset = 0x4, fixed_abs, tag = 'smem constant byte address 0x4 - core index']
  #allocation1 [shape = 'u32[144,128]{1,0:T(1,128)}', space=vmem, size = 0x12000, scoped, tag = 'internal scratch']
  #allocation2 [shape = 'f32[1,4]{1,0:T(1,128)}', space=vmem, size = 0x200, scoped, tag = 'scratch operand']
  %s0 = inlined_call_operand.vmem [shape: f32[2], index: 0, kind: input, shape index: {}]
  %s1 = inlined_call_operand.vmem [shape: f32[128,4], index: 1, kind: input, shape index: {}]
  %s2 = inlined_call_operand.vmem [shape: f32[8,128], index: 2, kind: input, shape index: {}]
  %s3 = inlined_call_operand.vmem [shape: f32[8,128], index: 3, kind: input, shape index: {}]
  %s4 = inlined_call_operand.vmem [shape: f32[8,128], index: 4, kind: input, shape index: {}]
  %s5 = inlined_call_operand.hbm [shape: f32[8,128], index: 5, kind: output, shape index: {}]
  %s6 = sld [smem:[#allocation0]]
  $region42: #{tpu_custom_call.1} parent=0
    _
  %s8 = ssub.s32 1, %s6
  %s9 = scalar_select 0, %s8, %s6
  $region1: #{tpu_custom_call.1} parent=0
    #allocation3 [shape = 'u8[512]{0}', space=smem, size = 0x200, scoped, tag = 'input window, operand 0, single buffered']
    #allocation4 [shape = 's32[1]{0}', space=sflag, size = 0x4, scoped, tag = 'scoped memory for tpu_custom_call.1']
    #allocation5 [shape = 's32[1]{0}', space=sflag, size = 0x4, scoped, tag = 'scoped memory for tpu_custom_call.1']
    #allocation6 [shape = 'u8[4096]{0}', space=vmem, size = 0x1000, scoped, tag = 'output window, operand 0, single buffered']
    %10 = vsyncpa [#allocation5], 0
    %11 = vsyncpa [#allocation4], 0
    // Predicated region
    $region2: #{tpu_custom_call.1} parent=1 // pred_check
      _
    $region3: #{tpu_custom_call.1} parent=1 // pred_check_branch
      %13 = sbr.rel (0) target = $region5
    $region4: #{tpu_custom_call.1} parent=1 // pred_region
      %s15 = ssub.s32 16, 16
      %16 = vsyncadd [#allocation5], %s15
      %s18 = sshll.u32 %s0, 4
      %s19 = int_to_ptr.vmem [resolvable:$true] %s18
      %21 = dma.vmem_to_smem %s19, 16, [#allocation3], [#allocation5]
    $region5: #{tpu_custom_call.1} parent=1 // pred_fallthru
      _
    // Predicated region
    $region6: #{tpu_custom_call.1} parent=1 // pred_check
      _
    $region7: #{tpu_custom_call.1} parent=1 // pred_check_branch
      %23 = sbr.rel (0) target = $region9
    $region8: #{tpu_custom_call.1} parent=1 // pred_region
      _
    $region9: #{tpu_custom_call.1} parent=1 // pred_fallthru
      _
    // Predicated region
    $region10: #{tpu_custom_call.1} parent=1 // pred_check
      _
    $region11: #{tpu_custom_call.1} parent=1 // pred_check_branch
      %25 = sbr.rel (0) target = $region13
    $region12: #{tpu_custom_call.1} parent=1 // pred_region
      %s26 = sadd.s32 0, 0
      %p27 = scmp.lt.s32.totalorder %s26, 0
      %s28 = scalar_select %p27, %s26, 0
      %p29 = scmp.lt.s32.totalorder %s28, 0
      %s30 = scalar_select %p29, %s28, 0
      %s31 = smul.addr %s30, 8
      %s32 = scalar_lea.vmem %s2, %s31
      %s33 = sadd.s32 0, 0
      %p34 = scmp.lt.s32.totalorder %s33, 0
      %s35 = scalar_select %p34, %s33, 0
    $region13: #{tpu_custom_call.1} parent=1 // pred_fallthru
      _
    // Predicated region
    $region14: #{tpu_custom_call.1} parent=1 // pred_check
      _
    $region15: #{tpu_custom_call.1} parent=1 // pred_check_branch
      %37 = sbr.rel (0) target = $region17
    $region16: #{tpu_custom_call.1} parent=1 // pred_region
      %s38 = sadd.s32 0, 0
      %p39 = scmp.lt.s32.totalorder %s38, 0
      %s40 = scalar_select %p39, %s38, 0
      %p41 = scmp.lt.s32.totalorder %s40, 0
      %s42 = scalar_select %p41, %s40, 0
      %s43 = smul.addr %s42, 8
      %s44 = scalar_lea.vmem %s3, %s43
      %s45 = sadd.s32 0, 0
      %p46 = scmp.lt.s32.totalorder %s45, 0
      %s47 = scalar_select %p46, %s45, 0
    $region17: #{tpu_custom_call.1} parent=1 // pred_fallthru
      _
    // Predicated region
    $region18: #{tpu_custom_call.1} parent=1 // pred_check
      _
    $region19: #{tpu_custom_call.1} parent=1 // pred_check_branch
      %49 = sbr.rel (0) target = $region21
    $region20: #{tpu_custom_call.1} parent=1 // pred_region
      %s50 = sadd.s32 0, 0
      %p51 = scmp.lt.s32.totalorder %s50, 0
      %s52 = scalar_select %p51, %s50, 0
      %p53 = scmp.lt.s32.totalorder %s52, 0
      %s54 = scalar_select %p53, %s52, 0
      %s55 = smul.addr %s54, 8
      %s56 = scalar_lea.vmem %s4, %s55
      %s57 = sadd.s32 0, 0
      %p58 = scmp.lt.s32.totalorder %s57, 0
      %s59 = scalar_select %p58, %s57, 0
    $region21: #{tpu_custom_call.1} parent=1 // pred_fallthru
      _
    // Predicated region
    $region22: #{tpu_custom_call.1} parent=1 // pred_check
      _
    $region23: #{tpu_custom_call.1} parent=1 // pred_check_branch
      %61 = sbr.rel (0) target = $region25
    $region24: #{tpu_custom_call.1} parent=1 // pred_region
      %62 = dma.done [#allocation5], 16
    $region25: #{tpu_custom_call.1} parent=1 // pred_fallthru
      _
    %63 = sfence
    %s64 = sadd.s32 0, 0
    %p65 = scmp.lt.s32.totalorder %s64, 0
    %s66 = scalar_select %p65, %s64, 0
    %p67 = scmp.lt.s32.totalorder %s66, 0
    %s68 = scalar_select %p67, %s66, 0
    %s69 = smul.addr %s68, 8
    %s70 = scalar_lea.vmem %s2, %s69
    %s71 = sadd.s32 0, 0
    %p72 = scmp.lt.s32.totalorder %s71, 0
    %s73 = scalar_select %p72, %s71, 0
    %p74 = scmp.lt.s32.totalorder %s73, 0
    %s75 = scalar_select %p74, %s73, 0
    %s76 = smul.addr %s75, 8
    %s77 = scalar_lea.vmem %s3, %s76
    %s78 = sadd.s32 0, 0
    %p79 = scmp.lt.s32.totalorder %s78, 0
    %s80 = scalar_select %p79, %s78, 0
    %p81 = scmp.lt.s32.totalorder %s80, 0
    %s82 = scalar_select %p81, %s80, 0
    %s83 = smul.addr %s82, 8
    %s84 = scalar_lea.vmem %s4, %s83
    %s85 = sadd.s32 0, 0
    %p86 = scmp.lt.s32.totalorder %s85, 0
    %s87 = scalar_select %p86, %s85, 0
    %p88 = scmp.lt.s32.totalorder %s87, 0
    %s89 = scalar_select %p88, %s87, 0
    %s90 = smul.addr %s89, 8
    %s91 = scalar_lea.vmem %s2, %s90
    %s92 = sadd.s32 0, 0
    %p93 = scmp.lt.s32.totalorder %s92, 0
    %s94 = scalar_select %p93, %s92, 0
    %s95 = sadd.s32 0, 0
    %p96 = scmp.lt.s32.totalorder %s95, 0
    %s97 = scalar_select %p96, %s95, 0
    %p98 = scmp.lt.s32.totalorder %s97, 0
    %s99 = scalar_select %p98, %s97, 0
    %s100 = smul.addr %s99, 8
    %s101 = scalar_lea.vmem %s3, %s100
    %s102 = sadd.s32 0, 0
    %p103 = scmp.lt.s32.totalorder %s102, 0
    %s104 = scalar_select %p103, %s102, 0
    %s105 = sadd.s32 0, 0
    %p106 = scmp.lt.s32.totalorder %s105, 0
    %s107 = scalar_select %p106, %s105, 0
    %p108 = scmp.lt.s32.totalorder %s107, 0
    %s109 = scalar_select %p108, %s107, 0
    %s110 = smul.addr %s109, 8
    %s111 = scalar_lea.vmem %s4, %s110
    %s112 = sadd.s32 0, 0
    %p113 = scmp.lt.s32.totalorder %s112, 0
    %s114 = scalar_select %p113, %s112, 0
    %p115 = scmp.eq.s32.totalorder 0, 0
    // Predicated region
    $region26: #{tpu_custom_call.1} parent=1 // pred_check
      %p116 = pneg %p115
    $region27: #{tpu_custom_call.1} parent=1 // pred_check_branch
      %118 = sbr.rel (%p116) target = $region29
    $region28: #{tpu_custom_call.1} parent=1 // pred_region
      %vm119 = vcmask 24576
      %120 = vst.msk [vmem:[#allocation2] sm:$0x1] %vm119, 0.0
    $region29: #{tpu_custom_call.1} parent=1 // pred_fallthru
      _
    %s121 = sld [smem:[#allocation3]]
    %s122 = sld [smem:[#allocation3 + $0x1]]
    %v123 = vld [vmem:[%s91] sm:$0xff]
    %v124 = vld [vmem:[%s101] sm:$0xff]
    %v125 = vld [vmem:[%s111] sm:$0xff]
    %v126 = vsub.f32 %v123, %v124
    %v127 = vadd.f32 %v126, 1e-06
    %v128 = vsub.f32 %v123, %v125
    %v129 = vadd.f32 %v128, 1e-06
    %v130 = vmul.f32 %v127, %v127
    %v131 = vmul.f32 %v129, %v129
    %v132 = vld [vmem:[%s1] sm:$0xff]
    %v133 = vld [vmem:[%s1 + $0x8] sm:$0xff]
    %v134 = vld [vmem:[%s1 + $0x10] sm:$0xff]
    %v135 = vld [vmem:[%s1 + $0x18] sm:$0xff]
    %v136 = vld [vmem:[%s1 + $0x20] sm:$0xff]
    %v137 = vld [vmem:[%s1 + $0x28] sm:$0xff]
    %v138 = vld [vmem:[%s1 + $0x30] sm:$0xff]
    %v139 = vld [vmem:[%s1 + $0x38] sm:$0xff]
    %v140 = vld [vmem:[%s1 + $0x40] sm:$0xff]
    %v141 = vld [vmem:[%s1 + $0x48] sm:$0xff]
    %v142 = vld [vmem:[%s1 + $0x50] sm:$0xff]
    %v143 = vld [vmem:[%s1 + $0x58] sm:$0xff]
    %v144 = vld [vmem:[%s1 + $0x60] sm:$0xff]
    %v145 = vld [vmem:[%s1 + $0x68] sm:$0xff]
    %v146 = vld [vmem:[%s1 + $0x70] sm:$0xff]
    %v147 = vld [vmem:[%s1 + $0x78] sm:$0xff]
    %148 = vmatprep.subr.mxu0 0.0
    %v149 = vand.u32 %v132, 4294901760
    %150 = vmatpush1.msra.mxu0 %v149
    %151 = vmatprep.subr.mxu0 0.0
    %v152 = vand.u32 %v133, 4294901760
    %153 = vmatpush1.msra.mxu0 %v152
    %154 = vmatprep.subr.mxu0 0.0
    %v155 = vand.u32 %v134, 4294901760
    %156 = vmatpush1.msra.mxu0 %v155
    %157 = vmatprep.subr.mxu0 0.0
    %v158 = vand.u32 %v135, 4294901760
    %159 = vmatpush1.msra.mxu0 %v158
    %160 = vmatprep.subr.mxu0 0.0
    %v161 = vand.u32 %v136, 4294901760
    %162 = vmatpush1.msra.mxu0 %v161
    %163 = vmatprep.subr.mxu0 0.0
    %v164 = vand.u32 %v137, 4294901760
    %165 = vmatpush1.msra.mxu0 %v164
    %166 = vmatprep.subr.mxu0 0.0
    %v167 = vand.u32 %v138, 4294901760
    %168 = vmatpush1.msra.mxu0 %v167
    %169 = vmatprep.subr.mxu0 0.0
    %v170 = vand.u32 %v139, 4294901760
    %171 = vmatpush1.msra.mxu0 %v170
    %172 = vmatprep.subr.mxu0 0.0
    %v173 = vand.u32 %v140, 4294901760
    %174 = vmatpush1.msra.mxu0 %v173
    %175 = vmatprep.subr.mxu0 0.0
    %v176 = vand.u32 %v141, 4294901760
    %177 = vmatpush1.msra.mxu0 %v176
    %178 = vmatprep.subr.mxu0 0.0
    %v179 = vand.u32 %v142, 4294901760
    %180 = vmatpush1.msra.mxu0 %v179
    %181 = vmatprep.subr.mxu0 0.0
    %v182 = vand.u32 %v143, 4294901760
    %183 = vmatpush1.msra.mxu0 %v182
    %184 = vmatprep.subr.mxu0 0.0
    %v185 = vand.u32 %v144, 4294901760
    %186 = vmatpush1.msra.mxu0 %v185
    %187 = vmatprep.subr.mxu0 0.0
    %v188 = vand.u32 %v145, 4294901760
    %189 = vmatpush1.msra.mxu0 %v188
    %190 = vmatprep.subr.mxu0 0.0
    %v191 = vand.u32 %v146, 4294901760
    %192 = vmatpush1.msra.mxu0 %v191
    %193 = vmatprep.subr.mxu0 0.0
    %v194 = vand.u32 %v147, 4294901760
    %195 = vmatpush1.msra.mxu0 %v194
    %196 = vmatprep.subr.mxu0 0.0
    %197 = vmatpush1.msra.mxu0 0.0
    %198 = vmatprep.subr.mxu0 0.0
    %199 = vmatpush1.msra.mxu0 0.0
    %200 = vmatprep.subr.mxu0 0.0
    %201 = vmatpush1.msra.mxu0 0.0
    %202 = vmatprep.subr.mxu0 0.0
    %203 = vmatpush1.msra.mxu0 0.0
    %204 = vmatprep.subr.mxu0 0.0
    %205 = vmatpush1.msra.mxu0 0.0
    %206 = vmatprep.subr.mxu0 0.0
    %207 = vmatpush1.msra.mxu0 0.0
    %208 = vmatprep.subr.mxu0 0.0
    %209 = vmatpush1.msra.mxu0 0.0
    %210 = vmatprep.subr.mxu0 0.0
    %211 = vmatpush1.msra.mxu0 0.0
    %212 = vmatprep.subr.mxu0 0.0
    %213 = vmatpush1.msra.mxu0 0.0
    %214 = vmatprep.subr.mxu0 0.0
    %215 = vmatpush1.msra.mxu0 0.0
    %216 = vmatprep.subr.mxu0 0.0
    %217 = vmatpush1.msra.mxu0 0.0
    %218 = vmatprep.subr.mxu0 0.0
    %219 = vmatpush1.msra.mxu0 0.0
    %220 = vmatprep.subr.mxu0 0.0
    %221 = vmatpush1.msra.mxu0 0.0
    %222 = vmatprep.subr.mxu0 0.0
    %223 = vmatpush1.msra.mxu0 0.0
    %224 = vmatprep.subr.mxu0 0.0
    %225 = vmatpush1.msra.mxu0 0.0
    %226 = vmatprep.subr.mxu0 0.0
    %227 = vmatpush1.msra.mxu0 0.0
    %228 = vmatprep.mubr.f32.mxu0 0.0
    %v229 = vand.u32 %v130, 4294901760
    %v230 = vsub.f32 %v130, %v229
    %v231 = vand.u32 %v230, 4294901760
    %v232 = vsub.f32 %v230, %v231
    %v233 = vand.u32 %v232, 4294901760
    %234 = vmatmul.mubr.f32.gmra.mrb[0].mxu0 %v233
    %v235 = vpop.f32.mrb[0].mxu0
    %v236 = vadd.f32 0.0, %v235
    %v237 = vpop.f32.mrb[0].mxu0
    %238 = vdwg.mxu0
    %239 = vmatprep.subr.mxu0 0.0
    %v240 = vand.u32 %v132, 4294901760
    %v241 = vsub.f32 %v132, %v240
    %v242 = vand.u32 %v241, 4294901760
    %v243 = vsub.f32 %v241, %v242
    %v244 = vand.u32 %v243, 4294901760
    %245 = vmatpush1.msra.mxu0 %v244
    %246 = vmatprep.subr.mxu0 0.0
    %v247 = vand.u32 %v133, 4294901760
    %v248 = vsub.f32 %v133, %v247
    %v249 = vand.u32 %v248, 4294901760
    %v250 = vsub.f32 %v248, %v249
    %v251 = vand.u32 %v250, 4294901760
    %252 = vmatpush1.msra.mxu0 %v251
    %253 = vmatprep.subr.mxu0 0.0
    %v254 = vand.u32 %v134, 4294901760
    %v255 = vsub.f32 %v134, %v254
    %v256 = vand.u32 %v255, 4294901760
    %v257 = vsub.f32 %v255, %v256
    %v258 = vand.u32 %v257, 4294901760
    %259 = vmatpush1.msra.mxu0 %v258
    %260 = vmatprep.subr.mxu0 0.0
    %v261 = vand.u32 %v135, 4294901760
    %v262 = vsub.f32 %v135, %v261
    %v263 = vand.u32 %v262, 4294901760
    %v264 = vsub.f32 %v262, %v263
    %v265 = vand.u32 %v264, 4294901760
    %266 = vmatpush1.msra.mxu0 %v265
    %267 = vmatprep.subr.mxu0 0.0
    %v268 = vand.u32 %v136, 4294901760
    %v269 = vsub.f32 %v136, %v268
    %v270 = vand.u32 %v269, 4294901760
    %v271 = vsub.f32 %v269, %v270
    %v272 = vand.u32 %v271, 4294901760
    %273 = vmatpush1.msra.mxu0 %v272
    %274 = vmatprep.subr.mxu0 0.0
    %v275 = vand.u32 %v137, 4294901760
    %v276 = vsub.f32 %v137, %v275
    %v277 = vand.u32 %v276, 4294901760
    %v278 = vsub.f32 %v276, %v277
    %v279 = vand.u32 %v278, 4294901760
    %280 = vmatpush1.msra.mxu0 %v279
    %281 = vmatprep.subr.mxu0 0.0
    %v282 = vand.u32 %v138, 4294901760
    %v283 = vsub.f32 %v138, %v282
    %v284 = vand.u32 %v283, 4294901760
    %v285 = vsub.f32 %v283, %v284
    %v286 = vand.u32 %v285, 4294901760
    %287 = vmatpush1.msra.mxu0 %v286
    %288 = vmatprep.subr.mxu0 0.0
    %v289 = vand.u32 %v139, 4294901760
    %v290 = vsub.f32 %v139, %v289
    %v291 = vand.u32 %v290, 4294901760
    %v292 = vsub.f32 %v290, %v291
    %v293 = vand.u32 %v292, 4294901760
    %294 = vmatpush1.msra.mxu0 %v293
    %295 = vmatprep.subr.mxu0 0.0
    %v296 = vand.u32 %v140, 4294901760
    %v297 = vsub.f32 %v140, %v296
    %v298 = vand.u32 %v297, 4294901760
    %v299 = vsub.f32 %v297, %v298
    %v300 = vand.u32 %v299, 4294901760
    %301 = vmatpush1.msra.mxu0 %v300
    %302 = vmatprep.subr.mxu0 0.0
    %v303 = vand.u32 %v141, 4294901760
    %v304 = vsub.f32 %v141, %v303
    %v305 = vand.u32 %v304, 4294901760
    %v306 = vsub.f32 %v304, %v305
    %v307 = vand.u32 %v306, 4294901760
    %308 = vmatpush1.msra.mxu0 %v307
    %309 = vmatprep.subr.mxu0 0.0
    %v310 = vand.u32 %v142, 4294901760
    %v311 = vsub.f32 %v142, %v310
    %v312 = vand.u32 %v311, 4294901760
    %v313 = vsub.f32 %v311, %v312
    %v314 = vand.u32 %v313, 4294901760
    %315 = vmatpush1.msra.mxu0 %v314
    %316 = vmatprep.subr.mxu0 0.0
    %v317 = vand.u32 %v143, 4294901760
    %v318 = vsub.f32 %v143, %v317
    %v319 = vand.u32 %v318, 4294901760
    %v320 = vsub.f32 %v318, %v319
    %v321 = vand.u32 %v320, 4294901760
    %322 = vmatpush1.msra.mxu0 %v321
    %323 = vmatprep.subr.mxu0 0.0
    %v324 = vand.u32 %v144, 4294901760
    %v325 = vsub.f32 %v144, %v324
    %v326 = vand.u32 %v325, 4294901760
    %v327 = vsub.f32 %v325, %v326
    %v328 = vand.u32 %v327, 4294901760
    %329 = vmatpush1.msra.mxu0 %v328
    %330 = vmatprep.subr.mxu0 0.0
    %v331 = vand.u32 %v145, 4294901760
    %v332 = vsub.f32 %v145, %v331
    %v333 = vand.u32 %v332, 4294901760
    %v334 = vsub.f32 %v332, %v333
    %v335 = vand.u32 %v334, 4294901760
    %336 = vmatpush1.msra.mxu0 %v335
    %337 = vmatprep.subr.mxu0 0.0
    %v338 = vand.u32 %v146, 4294901760
    %v339 = vsub.f32 %v146, %v338
    %v340 = vand.u32 %v339, 4294901760
    %v341 = vsub.f32 %v339, %v340
    %v342 = vand.u32 %v341, 4294901760
    %343 = vmatpush1.msra.mxu0 %v342
    %344 = vmatprep.subr.mxu0 0.0
    %v345 = vand.u32 %v147, 4294901760
    %v346 = vsub.f32 %v147, %v345
    %v347 = vand.u32 %v346, 4294901760
    %v348 = vsub.f32 %v346, %v347
    %v349 = vand.u32 %v348, 4294901760
    %350 = vmatpush1.msra.mxu0 %v349
    %351 = vmatprep.subr.mxu0 0.0
    %352 = vmatpush1.msra.mxu0 0.0
    %353 = vmatprep.subr.mxu0 0.0
    %354 = vmatpush1.msra.mxu0 0.0
    %355 = vmatprep.subr.mxu0 0.0
    %356 = vmatpush1.msra.mxu0 0.0
    %357 = vmatprep.subr.mxu0 0.0
    %358 = vmatpush1.msra.mxu0 0.0
    %359 = vmatprep.subr.mxu0 0.0
    %360 = vmatpush1.msra.mxu0 0.0
    %361 = vmatprep.subr.mxu0 0.0
    %362 = vmatpush1.msra.mxu0 0.0
    %363 = vmatprep.subr.mxu0 0.0
    %364 = vmatpush1.msra.mxu0 0.0
    %365 = vmatprep.subr.mxu0 0.0
    %366 = vmatpush1.msra.mxu0 0.0
    %367 = vmatprep.subr.mxu0 0.0
    %368 = vmatpush1.msra.mxu0 0.0
    %369 = vmatprep.subr.mxu0 0.0
    %370 = vmatpush1.msra.mxu0 0.0
    %371 = vmatprep.subr.mxu0 0.0
    %372 = vmatpush1.msra.mxu0 0.0
    %373 = vmatprep.subr.mxu0 0.0
    %374 = vmatpush1.msra.mxu0 0.0
    %375 = vmatprep.subr.mxu0 0.0
    %376 = vmatpush1.msra.mxu0 0.0
    %377 = vmatprep.subr.mxu0 0.0
    %378 = vmatpush1.msra.mxu0 0.0
    %379 = vmatprep.subr.mxu0 0.0
    %380 = vmatpush1.msra.mxu0 0.0
    %381 = vmatprep.subr.mxu0 0.0
    %382 = vmatpush1.msra.mxu0 0.0
    %383 = vmatprep.mubr.f32.mxu0 0.0
    %v384 = vand.u32 %v130, 4294901760
    %385 = vmatmul.mubr.f32.gmra.mrb[0].mxu0 %v384
    %v386 = vpop.f32.mrb[0].mxu0
    %v387 = vadd.f32 %v236, %v386
    %v388 = vpop.f32.mrb[0].mxu0
    %389 = vdwg.mxu0
    %390 = vmatprep.subr.mxu0 0.0
    %v391 = vand.u32 %v132, 4294901760
    %v392 = vsub.f32 %v132, %v391
    %393 = vmatpush1.msra.mxu0 %v392
    %394 = vmatprep.subr.mxu0 0.0
    %v395 = vand.u32 %v133, 4294901760
    %v396 = vsub.f32 %v133, %v395
    %397 = vmatpush1.msra.mxu0 %v396
    %398 = vmatprep.subr.mxu0 0.0
    %v399 = vand.u32 %v134, 4294901760
    %v400 = vsub.f32 %v134, %v399
    %401 = vmatpush1.msra.mxu0 %v400
    %402 = vmatprep.subr.mxu0 0.0
    %v403 = vand.u32 %v135, 4294901760
    %v404 = vsub.f32 %v135, %v403
    %405 = vmatpush1.msra.mxu0 %v404
    %406 = vmatprep.subr.mxu0 0.0
    %v407 = vand.u32 %v136, 4294901760
    %v408 = vsub.f32 %v136, %v407
    %409 = vmatpush1.msra.mxu0 %v408
    %410 = vmatprep.subr.mxu0 0.0
    %v411 = vand.u32 %v137, 4294901760
    %v412 = vsub.f32 %v137, %v411
    %413 = vmatpush1.msra.mxu0 %v412
    %414 = vmatprep.subr.mxu0 0.0
    %v415 = vand.u32 %v138, 4294901760
    %v416 = vsub.f32 %v138, %v415
    %417 = vmatpush1.msra.mxu0 %v416
    %418 = vmatprep.subr.mxu0 0.0
    %v419 = vand.u32 %v139, 4294901760
    %v420 = vsub.f32 %v139, %v419
    %421 = vmatpush1.msra.mxu0 %v420
    %422 = vmatprep.subr.mxu0 0.0
    %v423 = vand.u32 %v140, 4294901760
    %v424 = vsub.f32 %v140, %v423
    %425 = vmatpush1.msra.mxu0 %v424
    %426 = vmatprep.subr.mxu0 0.0
    %v427 = vand.u32 %v141, 4294901760
    %v428 = vsub.f32 %v141, %v427
    %429 = vmatpush1.msra.mxu0 %v428
    %430 = vmatprep.subr.mxu0 0.0
    %v431 = vand.u32 %v142, 4294901760
    %v432 = vsub.f32 %v142, %v431
    %433 = vmatpush1.msra.mxu0 %v432
    %434 = vmatprep.subr.mxu0 0.0
    %v435 = vand.u32 %v143, 4294901760
    %v436 = vsub.f32 %v143, %v435
    %437 = vmatpush1.msra.mxu0 %v436
    %438 = vmatprep.subr.mxu0 0.0
    %v439 = vand.u32 %v144, 4294901760
    %v440 = vsub.f32 %v144, %v439
    %441 = vmatpush1.msra.mxu0 %v440
    %442 = vmatprep.subr.mxu0 0.0
    %v443 = vand.u32 %v145, 4294901760
    %v444 = vsub.f32 %v145, %v443
    %445 = vmatpush1.msra.mxu0 %v444
    %446 = vmatprep.subr.mxu0 0.0
    %v447 = vand.u32 %v146, 4294901760
    %v448 = vsub.f32 %v146, %v447
    %449 = vmatpush1.msra.mxu0 %v448
    %450 = vmatprep.subr.mxu0 0.0
    %v451 = vand.u32 %v147, 4294901760
    %v452 = vsub.f32 %v147, %v451
    %453 = vmatpush1.msra.mxu0 %v452
    %454 = vmatprep.subr.mxu0 0.0
    %455 = vmatpush1.msra.mxu0 0.0
    %456 = vmatprep.subr.mxu0 0.0
    %457 = vmatpush1.msra.mxu0 0.0
    %458 = vmatprep.subr.mxu0 0.0
    %459 = vmatpush1.msra.mxu0 0.0
    %460 = vmatprep.subr.mxu0 0.0
    %461 = vmatpush1.msra.mxu0 0.0
    %462 = vmatprep.subr.mxu0 0.0
    %463 = vmatpush1.msra.mxu0 0.0
    %464 = vmatprep.subr.mxu0 0.0
    %465 = vmatpush1.msra.mxu0 0.0
    %466 = vmatprep.subr.mxu0 0.0
    %467 = vmatpush1.msra.mxu0 0.0
    %468 = vmatprep.subr.mxu0 0.0
    %469 = vmatpush1.msra.mxu0 0.0
    %470 = vmatprep.subr.mxu0 0.0
    %471 = vmatpush1.msra.mxu0 0.0
    %472 = vmatprep.subr.mxu0 0.0
    %473 = vmatpush1.msra.mxu0 0.0
    %474 = vmatprep.subr.mxu0 0.0
    %475 = vmatpush1.msra.mxu0 0.0
    %476 = vmatprep.subr.mxu0 0.0
    %477 = vmatpush1.msra.mxu0 0.0
    %478 = vmatprep.subr.mxu0 0.0
    %479 = vmatpush1.msra.mxu0 0.0
    %480 = vmatprep.subr.mxu0 0.0
    %481 = vmatpush1.msra.mxu0 0.0
    %482 = vmatprep.subr.mxu0 0.0
    %483 = vmatpush1.msra.mxu0 0.0
    %484 = vmatprep.subr.mxu0 0.0
    %485 = vmatpush1.msra.mxu0 0.0
    %486 = vmatprep.mubr.f32.mxu0 0.0
    %v487 = vand.u32 %v130, 4294901760
    %v488 = vsub.f32 %v130, %v487
    %489 = vmatmul.mubr.f32.gmra.mrb[0].mxu0 %v488
    %v490 = vpop.f32.mrb[0].mxu0
    %v491 = vadd.f32 %v387, %v490
    %v492 = vpop.f32.mrb[0].mxu0
    %493 = vdwg.mxu0
    %494 = vmatprep.subr.mxu0 0.0
    %v495 = vand.u32 %v132, 4294901760
    %496 = vmatpush1.msra.mxu0 %v495
    %497 = vmatprep.subr.mxu0 0.0
    %v498 = vand.u32 %v133, 4294901760
    %499 = vmatpush1.msra.mxu0 %v498
    %500 = vmatprep.subr.mxu0 0.0
    %v501 = vand.u32 %v134, 4294901760
    %502 = vmatpush1.msra.mxu0 %v501
    %503 = vmatprep.subr.mxu0 0.0
    %v504 = vand.u32 %v135, 4294901760
    %505 = vmatpush1.msra.mxu0 %v504
    %506 = vmatprep.subr.mxu0 0.0
    %v507 = vand.u32 %v136, 4294901760
    %508 = vmatpush1.msra.mxu0 %v507
    %509 = vmatprep.subr.mxu0 0.0
    %v510 = vand.u32 %v137, 4294901760
    %511 = vmatpush1.msra.mxu0 %v510
    %512 = vmatprep.subr.mxu0 0.0
    %v513 = vand.u32 %v138, 4294901760
    %514 = vmatpush1.msra.mxu0 %v513
    %515 = vmatprep.subr.mxu0 0.0
    %v516 = vand.u32 %v139, 4294901760
    %517 = vmatpush1.msra.mxu0 %v516
    %518 = vmatprep.subr.mxu0 0.0
    %v519 = vand.u32 %v140, 4294901760
    %520 = vmatpush1.msra.mxu0 %v519
    %521 = vmatprep.subr.mxu0 0.0
    %v522 = vand.u32 %v141, 4294901760
    %523 = vmatpush1.msra.mxu0 %v522
    %524 = vmatprep.subr.mxu0 0.0
    %v525 = vand.u32 %v142, 4294901760
    %526 = vmatpush1.msra.mxu0 %v525
    %527 = vmatprep.subr.mxu0 0.0
    %v528 = vand.u32 %v143, 4294901760
    %529 = vmatpush1.msra.mxu0 %v528
    %530 = vmatprep.subr.mxu0 0.0
    %v531 = vand.u32 %v144, 4294901760
    %532 = vmatpush1.msra.mxu0 %v531
    %533 = vmatprep.subr.mxu0 0.0
    %v534 = vand.u32 %v145, 4294901760
    %535 = vmatpush1.msra.mxu0 %v534
    %536 = vmatprep.subr.mxu0 0.0
    %v537 = vand.u32 %v146, 4294901760
    %538 = vmatpush1.msra.mxu0 %v537
    %539 = vmatprep.subr.mxu0 0.0
    %v540 = vand.u32 %v147, 4294901760
    %541 = vmatpush1.msra.mxu0 %v540
    %542 = vmatprep.subr.mxu0 0.0
    %543 = vmatpush1.msra.mxu0 0.0
    %544 = vmatprep.subr.mxu0 0.0
    %545 = vmatpush1.msra.mxu0 0.0
    %546 = vmatprep.subr.mxu0 0.0
    %547 = vmatpush1.msra.mxu0 0.0
    %548 = vmatprep.subr.mxu0 0.0
    %549 = vmatpush1.msra.mxu0 0.0
    %550 = vmatprep.subr.mxu0 0.0
    %551 = vmatpush1.msra.mxu0 0.0
    %552 = vmatprep.subr.mxu0 0.0
    %553 = vmatpush1.msra.mxu0 0.0
    %554 = vmatprep.subr.mxu0 0.0
    %555 = vmatpush1.msra.mxu0 0.0
    %556 = vmatprep.subr.mxu0 0.0
    %557 = vmatpush1.msra.mxu0 0.0
    %558 = vmatprep.subr.mxu0 0.0
    %559 = vmatpush1.msra.mxu0 0.0
    %560 = vmatprep.subr.mxu0 0.0
    %561 = vmatpush1.msra.mxu0 0.0
    %562 = vmatprep.subr.mxu0 0.0
    %563 = vmatpush1.msra.mxu0 0.0
    %564 = vmatprep.subr.mxu0 0.0
    %565 = vmatpush1.msra.mxu0 0.0
    %566 = vmatprep.subr.mxu0 0.0
    %567 = vmatpush1.msra.mxu0 0.0
    %568 = vmatprep.subr.mxu0 0.0
    %569 = vmatpush1.msra.mxu0 0.0
    %570 = vmatprep.subr.mxu0 0.0
    %571 = vmatpush1.msra.mxu0 0.0
    %572 = vmatprep.subr.mxu0 0.0
    %573 = vmatpush1.msra.mxu0 0.0
    %574 = vmatprep.mubr.f32.mxu0 0.0
    %v575 = vand.u32 %v130, 4294901760
    %v576 = vsub.f32 %v130, %v575
    %v577 = vand.u32 %v576, 4294901760
    %578 = vmatmul.mubr.f32.gmra.mrb[0].mxu0 %v577
    %v579 = vpop.f32.mrb[0].mxu0
    %v580 = vadd.f32 %v491, %v579
    %v581 = vpop.f32.mrb[0].mxu0
    %582 = vdwg.mxu0
    %583 = vmatprep.subr.mxu0 0.0
    %v584 = vand.u32 %v132, 4294901760
    %v585 = vsub.f32 %v132, %v584
    %v586 = vand.u32 %v585, 4294901760
    %587 = vmatpush1.msra.mxu0 %v586
    %588 = vmatprep.subr.mxu0 0.0
    %v589 = vand.u32 %v133, 4294901760
    %v590 = vsub.f32 %v133, %v589
    %v591 = vand.u32 %v590, 4294901760
    %592 = vmatpush1.msra.mxu0 %v591
    %593 = vmatprep.subr.mxu0 0.0
    %v594 = vand.u32 %v134, 4294901760
    %v595 = vsub.f32 %v134, %v594
    %v596 = vand.u32 %v595, 4294901760
    %597 = vmatpush1.msra.mxu0 %v596
    %598 = vmatprep.subr.mxu0 0.0
    %v599 = vand.u32 %v135, 4294901760
    %v600 = vsub.f32 %v135, %v599
    %v601 = vand.u32 %v600, 4294901760
    %602 = vmatpush1.msra.mxu0 %v601
    %603 = vmatprep.subr.mxu0 0.0
    %v604 = vand.u32 %v136, 4294901760
    %v605 = vsub.f32 %v136, %v604
    %v606 = vand.u32 %v605, 4294901760
    %607 = vmatpush1.msra.mxu0 %v606
    %608 = vmatprep.subr.mxu0 0.0
    %v609 = vand.u32 %v137, 4294901760
    %v610 = vsub.f32 %v137, %v609
    %v611 = vand.u32 %v610, 4294901760
    %612 = vmatpush1.msra.mxu0 %v611
    %613 = vmatprep.subr.mxu0 0.0
    %v614 = vand.u32 %v138, 4294901760
    %v615 = vsub.f32 %v138, %v614
    %v616 = vand.u32 %v615, 4294901760
    %617 = vmatpush1.msra.mxu0 %v616
    %618 = vmatprep.subr.mxu0 0.0
    %v619 = vand.u32 %v139, 4294901760
    %v620 = vsub.f32 %v139, %v619
    %v621 = vand.u32 %v620, 4294901760
    %622 = vmatpush1.msra.mxu0 %v621
    %623 = vmatprep.subr.mxu0 0.0
    %v624 = vand.u32 %v140, 4294901760
    %v625 = vsub.f32 %v140, %v624
    %v626 = vand.u32 %v625, 4294901760
    %627 = vmatpush1.msra.mxu0 %v626
    %628 = vmatprep.subr.mxu0 0.0
    %v629 = vand.u32 %v141, 4294901760
    %v630 = vsub.f32 %v141, %v629
    %v631 = vand.u32 %v630, 4294901760
    %632 = vmatpush1.msra.mxu0 %v631
    %633 = vmatprep.subr.mxu0 0.0
    %v634 = vand.u32 %v142, 4294901760
    %v635 = vsub.f32 %v142, %v634
    %v636 = vand.u32 %v635, 4294901760
    %637 = vmatpush1.msra.mxu0 %v636
    %638 = vmatprep.subr.mxu0 0.0
    %v639 = vand.u32 %v143, 4294901760
    %v640 = vsub.f32 %v143, %v639
    %v641 = vand.u32 %v640, 4294901760
    %642 = vmatpush1.msra.mxu0 %v641
    %643 = vmatprep.subr.mxu0 0.0
    %v644 = vand.u32 %v144, 4294901760
    %v645 = vsub.f32 %v144, %v644
    %v646 = vand.u32 %v645, 4294901760
    %647 = vmatpush1.msra.mxu0 %v646
    %648 = vmatprep.subr.mxu0 0.0
    %v649 = vand.u32 %v145, 4294901760
    %v650 = vsub.f32 %v145, %v649
    %v651 = vand.u32 %v650, 4294901760
    %652 = vmatpush1.msra.mxu0 %v651
    %653 = vmatprep.subr.mxu0 0.0
    %v654 = vand.u32 %v146, 4294901760
    %v655 = vsub.f32 %v146, %v654
    %v656 = vand.u32 %v655, 4294901760
    %657 = vmatpush1.msra.mxu0 %v656
    %658 = vmatprep.subr.mxu0 0.0
    %v659 = vand.u32 %v147, 4294901760
    %v660 = vsub.f32 %v147, %v659
    %v661 = vand.u32 %v660, 4294901760
    %662 = vmatpush1.msra.mxu0 %v661
    %663 = vmatprep.subr.mxu0 0.0
    %664 = vmatpush1.msra.mxu0 0.0
    %665 = vmatprep.subr.mxu0 0.0
    %666 = vmatpush1.msra.mxu0 0.0
    %667 = vmatprep.subr.mxu0 0.0
    %668 = vmatpush1.msra.mxu0 0.0
    %669 = vmatprep.subr.mxu0 0.0
    %670 = vmatpush1.msra.mxu0 0.0
    %671 = vmatprep.subr.mxu0 0.0
    %672 = vmatpush1.msra.mxu0 0.0
    %673 = vmatprep.subr.mxu0 0.0
    %674 = vmatpush1.msra.mxu0 0.0
    %675 = vmatprep.subr.mxu0 0.0
    %676 = vmatpush1.msra.mxu0 0.0
    %677 = vmatprep.subr.mxu0 0.0
    %678 = vmatpush1.msra.mxu0 0.0
    %679 = vmatprep.subr.mxu0 0.0
    %680 = vmatpush1.msra.mxu0 0.0
    %681 = vmatprep.subr.mxu0 0.0
    %682 = vmatpush1.msra.mxu0 0.0
    %683 = vmatprep.subr.mxu0 0.0
    %684 = vmatpush1.msra.mxu0 0.0
    %685 = vmatprep.subr.mxu0 0.0
    %686 = vmatpush1.msra.mxu0 0.0
    %687 = vmatprep.subr.mxu0 0.0
    %688 = vmatpush1.msra.mxu0 0.0
    %689 = vmatprep.subr.mxu0 0.0
    %690 = vmatpush1.msra.mxu0 0.0
    %691 = vmatprep.subr.mxu0 0.0
    %692 = vmatpush1.msra.mxu0 0.0
    %693 = vmatprep.subr.mxu0 0.0
    %694 = vmatpush1.msra.mxu0 0.0
    %695 = vmatprep.mubr.f32.mxu0 0.0
    %v696 = vand.u32 %v130, 4294901760
    %697 = vmatmul.mubr.f32.gmra.mrb[0].mxu0 %v696
    %v698 = vpop.f32.mrb[0].mxu0
    %v699 = vadd.f32 %v580, %v698
    %v700 = vpop.f32.mrb[0].mxu0
    %701 = vdwg.mxu0
    %702 = vmatprep.subr.mxu0 0.0
    %v703 = vand.u32 %v132, 4294901760
    %704 = vmatpush1.msra.mxu0 %v703
    %705 = vmatprep.subr.mxu0 0.0
    %v706 = vand.u32 %v133, 4294901760
    %707 = vmatpush1.msra.mxu0 %v706
    %708 = vmatprep.subr.mxu0 0.0
    %v709 = vand.u32 %v134, 4294901760
    %710 = vmatpush1.msra.mxu0 %v709
    %711 = vmatprep.subr.mxu0 0.0
    %v712 = vand.u32 %v135, 4294901760
    %713 = vmatpush1.msra.mxu0 %v712
    %714 = vmatprep.subr.mxu0 0.0
    %v715 = vand.u32 %v136, 4294901760
    %716 = vmatpush1.msra.mxu0 %v715
    %717 = vmatprep.subr.mxu0 0.0
    %v718 = vand.u32 %v137, 4294901760
    %719 = vmatpush1.msra.mxu0 %v718
    %720 = vmatprep.subr.mxu0 0.0
    %v721 = vand.u32 %v138, 4294901760
    %722 = vmatpush1.msra.mxu0 %v721
    %723 = vmatprep.subr.mxu0 0.0
    %v724 = vand.u32 %v139, 4294901760
    %725 = vmatpush1.msra.mxu0 %v724
    %726 = vmatprep.subr.mxu0 0.0
    %v727 = vand.u32 %v140, 4294901760
    %728 = vmatpush1.msra.mxu0 %v727
    %729 = vmatprep.subr.mxu0 0.0
    %v730 = vand.u32 %v141, 4294901760
    %731 = vmatpush1.msra.mxu0 %v730
    %732 = vmatprep.subr.mxu0 0.0
    %v733 = vand.u32 %v142, 4294901760
    %734 = vmatpush1.msra.mxu0 %v733
    %735 = vmatprep.subr.mxu0 0.0
    %v736 = vand.u32 %v143, 4294901760
    %737 = vmatpush1.msra.mxu0 %v736
    %738 = vmatprep.subr.mxu0 0.0
    %v739 = vand.u32 %v144, 4294901760
    %740 = vmatpush1.msra.mxu0 %v739
    %741 = vmatprep.subr.mxu0 0.0
    %v742 = vand.u32 %v145, 4294901760
    %743 = vmatpush1.msra.mxu0 %v742
    %744 = vmatprep.subr.mxu0 0.0
    %v745 = vand.u32 %v146, 4294901760
    %746 = vmatpush1.msra.mxu0 %v745
    %747 = vmatprep.subr.mxu0 0.0
    %v748 = vand.u32 %v147, 4294901760
    %749 = vmatpush1.msra.mxu0 %v748
    %750 = vmatprep.subr.mxu0 0.0
    %751 = vmatpush1.msra.mxu0 0.0
    %752 = vmatprep.subr.mxu0 0.0
    %753 = vmatpush1.msra.mxu0 0.0
    %754 = vmatprep.subr.mxu0 0.0
    %755 = vmatpush1.msra.mxu0 0.0
    %756 = vmatprep.subr.mxu0 0.0
    %757 = vmatpush1.msra.mxu0 0.0
    %758 = vmatprep.subr.mxu0 0.0
    %759 = vmatpush1.msra.mxu0 0.0
    %760 = vmatprep.subr.mxu0 0.0
    %761 = vmatpush1.msra.mxu0 0.0
    %762 = vmatprep.subr.mxu0 0.0
    %763 = vmatpush1.msra.mxu0 0.0
    %764 = vmatprep.subr.mxu0 0.0
    %765 = vmatpush1.msra.mxu0 0.0
    %766 = vmatprep.subr.mxu0 0.0
    %767 = vmatpush1.msra.mxu0 0.0
    %768 = vmatprep.subr.mxu0 0.0
    %769 = vmatpush1.msra.mxu0 0.0
    %770 = vmatprep.subr.mxu0 0.0
    %771 = vmatpush1.msra.mxu0 0.0
    %772 = vmatprep.subr.mxu0 0.0
    %773 = vmatpush1.msra.mxu0 0.0
    %774 = vmatprep.subr.mxu0 0.0
    %775 = vmatpush1.msra.mxu0 0.0
    %776 = vmatprep.subr.mxu0 0.0
    %777 = vmatpush1.msra.mxu0 0.0
    %778 = vmatprep.subr.mxu0 0.0
    %779 = vmatpush1.msra.mxu0 0.0
    %780 = vmatprep.subr.mxu0 0.0
    %781 = vmatpush1.msra.mxu0 0.0
    %782 = vmatprep.mubr.f32.mxu0 0.0
    %v783 = vand.u32 %v130, 4294901760
    %784 = vmatmul.mubr.f32.gmra.mrb[0].mxu0 %v783
    %v785 = vpop.f32.mrb[0].mxu0
    %v786 = vadd.f32 %v699, %v785
    %v787 = vpop.f32.mrb[0].mxu0
    %788 = vdwg.mxu0
    %789 = vmatprep.subr.mxu0 0.0
    %v790 = vand.u32 %v132, 4294901760
    %791 = vmatpush1.msra.mxu0 %v790
    %792 = vmatprep.subr.mxu0 0.0
    %v793 = vand.u32 %v133, 4294901760
    %794 = vmatpush1.msra.mxu0 %v793
    %795 = vmatprep.subr.mxu0 0.0
    %v796 = vand.u32 %v134, 4294901760
    %797 = vmatpush1.msra.mxu0 %v796
    %798 = vmatprep.subr.mxu0 0.0
    %v799 = vand.u32 %v135, 4294901760
    %800 = vmatpush1.msra.mxu0 %v799
    %801 = vmatprep.subr.mxu0 0.0
    %v802 = vand.u32 %v136, 4294901760
    %803 = vmatpush1.msra.mxu0 %v802
    %804 = vmatprep.subr.mxu0 0.0
    %v805 = vand.u32 %v137, 4294901760
    %806 = vmatpush1.msra.mxu0 %v805
    %807 = vmatprep.subr.mxu0 0.0
    %v808 = vand.u32 %v138, 4294901760
    %809 = vmatpush1.msra.mxu0 %v808
    %810 = vmatprep.subr.mxu0 0.0
    %v811 = vand.u32 %v139, 4294901760
    %812 = vmatpush1.msra.mxu0 %v811
    %813 = vmatprep.subr.mxu0 0.0
    %v814 = vand.u32 %v140, 4294901760
    %815 = vmatpush1.msra.mxu0 %v814
    %816 = vmatprep.subr.mxu0 0.0
    %v817 = vand.u32 %v141, 4294901760
    %818 = vmatpush1.msra.mxu0 %v817
    %819 = vmatprep.subr.mxu0 0.0
    %v820 = vand.u32 %v142, 4294901760
    %821 = vmatpush1.msra.mxu0 %v820
    %822 = vmatprep.subr.mxu0 0.0
    %v823 = vand.u32 %v143, 4294901760
    %824 = vmatpush1.msra.mxu0 %v823
    %825 = vmatprep.subr.mxu0 0.0
    %v826 = vand.u32 %v144, 4294901760
    %827 = vmatpush1.msra.mxu0 %v826
    %828 = vmatprep.subr.mxu0 0.0
    %v829 = vand.u32 %v145, 4294901760
    %830 = vmatpush1.msra.mxu0 %v829
    %831 = vmatprep.subr.mxu0 0.0
    %v832 = vand.u32 %v146, 4294901760
    %833 = vmatpush1.msra.mxu0 %v832
    %834 = vmatprep.subr.mxu0 0.0
    %v835 = vand.u32 %v147, 4294901760
    %836 = vmatpush1.msra.mxu0 %v835
    %837 = vmatprep.subr.mxu0 0.0
    %838 = vmatpush1.msra.mxu0 0.0
    %839 = vmatprep.subr.mxu0 0.0
    %840 = vmatpush1.msra.mxu0 0.0
    %841 = vmatprep.subr.mxu0 0.0
    %842 = vmatpush1.msra.mxu0 0.0
    %843 = vmatprep.subr.mxu0 0.0
    %844 = vmatpush1.msra.mxu0 0.0
    %845 = vmatprep.subr.mxu0 0.0
    %846 = vmatpush1.msra.mxu0 0.0
    %847 = vmatprep.subr.mxu0 0.0
    %848 = vmatpush1.msra.mxu0 0.0
    %849 = vmatprep.subr.mxu0 0.0
    %850 = vmatpush1.msra.mxu0 0.0
    %851 = vmatprep.subr.mxu0 0.0
    %852 = vmatpush1.msra.mxu0 0.0
    %853 = vmatprep.subr.mxu0 0.0
    %854 = vmatpush1.msra.mxu0 0.0
    %855 = vmatprep.subr.mxu0 0.0
    %856 = vmatpush1.msra.mxu0 0.0
    %857 = vmatprep.subr.mxu0 0.0
    %858 = vmatpush1.msra.mxu0 0.0
    %859 = vmatprep.subr.mxu0 0.0
    %860 = vmatpush1.msra.mxu0 0.0
    %861 = vmatprep.subr.mxu0 0.0
    %862 = vmatpush1.msra.mxu0 0.0
    %863 = vmatprep.subr.mxu0 0.0
    %864 = vmatpush1.msra.mxu0 0.0
    %865 = vmatprep.subr.mxu0 0.0
    %866 = vmatpush1.msra.mxu0 0.0
    %867 = vmatprep.subr.mxu0 0.0
    %868 = vmatpush1.msra.mxu0 0.0
    %869 = vmatprep.mubr.f32.mxu0 0.0
    %v870 = vand.u32 %v131, 4294901760
    %v871 = vsub.f32 %v131, %v870
    %v872 = vand.u32 %v871, 4294901760
    %v873 = vsub.f32 %v871, %v872
    %v874 = vand.u32 %v873, 4294901760
    %875 = vmatmul.mubr.f32.gmra.mrb[0].mxu0 %v874
    %v876 = vpop.f32.mrb[0].mxu0
    %v877 = vadd.f32 0.0, %v876
    %v878 = vpop.f32.mrb[0].mxu0
    %879 = vdwg.mxu0
    %880 = vmatprep.subr.mxu0 0.0
    %v881 = vand.u32 %v132, 4294901760
    %v882 = vsub.f32 %v132, %v881
    %v883 = vand.u32 %v882, 4294901760
    %v884 = vsub.f32 %v882, %v883
    %v885 = vand.u32 %v884, 4294901760
    %886 = vmatpush1.msra.mxu0 %v885
    %887 = vmatprep.subr.mxu0 0.0
    %v888 = vand.u32 %v133, 4294901760
    %v889 = vsub.f32 %v133, %v888
    %v890 = vand.u32 %v889, 4294901760
    %v891 = vsub.f32 %v889, %v890
    %v892 = vand.u32 %v891, 4294901760
    %893 = vmatpush1.msra.mxu0 %v892
    %894 = vmatprep.subr.mxu0 0.0
    %v895 = vand.u32 %v134, 4294901760
    %v896 = vsub.f32 %v134, %v895
    %v897 = vand.u32 %v896, 4294901760
    %v898 = vsub.f32 %v896, %v897
    %v899 = vand.u32 %v898, 4294901760
    %900 = vmatpush1.msra.mxu0 %v899
    %901 = vmatprep.subr.mxu0 0.0
    %v902 = vand.u32 %v135, 4294901760
    %v903 = vsub.f32 %v135, %v902
    %v904 = vand.u32 %v903, 4294901760
    %v905 = vsub.f32 %v903, %v904
    %v906 = vand.u32 %v905, 4294901760
    %907 = vmatpush1.msra.mxu0 %v906
    %908 = vmatprep.subr.mxu0 0.0
    %v909 = vand.u32 %v136, 4294901760
    %v910 = vsub.f32 %v136, %v909
    %v911 = vand.u32 %v910, 4294901760
    %v912 = vsub.f32 %v910, %v911
    %v913 = vand.u32 %v912, 4294901760
    %914 = vmatpush1.msra.mxu0 %v913
    %915 = vmatprep.subr.mxu0 0.0
    %v916 = vand.u32 %v137, 4294901760
    %v917 = vsub.f32 %v137, %v916
    %v918 = vand.u32 %v917, 4294901760
    %v919 = vsub.f32 %v917, %v918
    %v920 = vand.u32 %v919, 4294901760
    %921 = vmatpush1.msra.mxu0 %v920
    %922 = vmatprep.subr.mxu0 0.0
    %v923 = vand.u32 %v138, 4294901760
    %v924 = vsub.f32 %v138, %v923
    %v925 = vand.u32 %v924, 4294901760
    %v926 = vsub.f32 %v924, %v925
    %v927 = vand.u32 %v926, 4294901760
    %928 = vmatpush1.msra.mxu0 %v927
    %929 = vmatprep.subr.mxu0 0.0
    %v930 = vand.u32 %v139, 4294901760
    %v931 = vsub.f32 %v139, %v930
    %v932 = vand.u32 %v931, 4294901760
    %v933 = vsub.f32 %v931, %v932
    %v934 = vand.u32 %v933, 4294901760
    %935 = vmatpush1.msra.mxu0 %v934
    %936 = vmatprep.subr.mxu0 0.0
    %v937 = vand.u32 %v140, 4294901760
    %v938 = vsub.f32 %v140, %v937
    %v939 = vand.u32 %v938, 4294901760
    %v940 = vsub.f32 %v938, %v939
    %v941 = vand.u32 %v940, 4294901760
    %942 = vmatpush1.msra.mxu0 %v941
    %943 = vmatprep.subr.mxu0 0.0
    %v944 = vand.u32 %v141, 4294901760
    %v945 = vsub.f32 %v141, %v944
    %v946 = vand.u32 %v945, 4294901760
    %v947 = vsub.f32 %v945, %v946
    %v948 = vand.u32 %v947, 4294901760
    %949 = vmatpush1.msra.mxu0 %v948
    %950 = vmatprep.subr.mxu0 0.0
    %v951 = vand.u32 %v142, 4294901760
    %v952 = vsub.f32 %v142, %v951
    %v953 = vand.u32 %v952, 4294901760
    %v954 = vsub.f32 %v952, %v953
    %v955 = vand.u32 %v954, 4294901760
    %956 = vmatpush1.msra.mxu0 %v955
    %957 = vmatprep.subr.mxu0 0.0
    %v958 = vand.u32 %v143, 4294901760
    %v959 = vsub.f32 %v143, %v958
    %v960 = vand.u32 %v959, 4294901760
    %v961 = vsub.f32 %v959, %v960
    %v962 = vand.u32 %v961, 4294901760
    %963 = vmatpush1.msra.mxu0 %v962
    %964 = vmatprep.subr.mxu0 0.0
    %v965 = vand.u32 %v144, 4294901760
    %v966 = vsub.f32 %v144, %v965
    %v967 = vand.u32 %v966, 4294901760
    %v968 = vsub.f32 %v966, %v967
    %v969 = vand.u32 %v968, 4294901760
    %970 = vmatpush1.msra.mxu0 %v969
    %971 = vmatprep.subr.mxu0 0.0
    %v972 = vand.u32 %v145, 4294901760
    %v973 = vsub.f32 %v145, %v972
    %v974 = vand.u32 %v973, 4294901760
    %v975 = vsub.f32 %v973, %v974
    %v976 = vand.u32 %v975, 4294901760
    %977 = vmatpush1.msra.mxu0 %v976
    %978 = vmatprep.subr.mxu0 0.0
    %v979 = vand.u32 %v146, 4294901760
    %v980 = vsub.f32 %v146, %v979
    %v981 = vand.u32 %v980, 4294901760
    %v982 = vsub.f32 %v980, %v981
    %v983 = vand.u32 %v982, 4294901760
    %984 = vmatpush1.msra.mxu0 %v983
    %985 = vmatprep.subr.mxu0 0.0
    %v986 = vand.u32 %v147, 4294901760
    %v987 = vsub.f32 %v147, %v986
    %v988 = vand.u32 %v987, 4294901760
    %v989 = vsub.f32 %v987, %v988
    %v990 = vand.u32 %v989, 4294901760
    %991 = vmatpush1.msra.mxu0 %v990
    %992 = vmatprep.subr.mxu0 0.0
    %993 = vmatpush1.msra.mxu0 0.0
    %994 = vmatprep.subr.mxu0 0.0
    %995 = vmatpush1.msra.mxu0 0.0
    %996 = vmatprep.subr.mxu0 0.0
    %997 = vmatpush1.msra.mxu0 0.0
    %998 = vmatprep.subr.mxu0 0.0
    %999 = vmatpush1.msra.mxu0 0.0
    %1000 = vmatprep.subr.mxu0 0.0
    %1001 = vmatpush1.msra.mxu0 0.0
    %1002 = vmatprep.subr.mxu0 0.0
    %1003 = vmatpush1.msra.mxu0 0.0
    %1004 = vmatprep.subr.mxu0 0.0
    %1005 = vmatpush1.msra.mxu0 0.0
    %1006 = vmatprep.subr.mxu0 0.0
    %1007 = vmatpush1.msra.mxu0 0.0
    %1008 = vmatprep.subr.mxu0 0.0
    %1009 = vmatpush1.msra.mxu0 0.0
    %1010 = vmatprep.subr.mxu0 0.0
    %1011 = vmatpush1.msra.mxu0 0.0
    %1012 = vmatprep.subr.mxu0 0.0
    %1013 = vmatpush1.msra.mxu0 0.0
    %1014 = vmatprep.subr.mxu0 0.0
    %1015 = vmatpush1.msra.mxu0 0.0
    %1016 = vmatprep.subr.mxu0 0.0
    %1017 = vmatpush1.msra.mxu0 0.0
    %1018 = vmatprep.subr.mxu0 0.0
    %1019 = vmatpush1.msra.mxu0 0.0
    %1020 = vmatprep.subr.mxu0 0.0
    %1021 = vmatpush1.msra.mxu0 0.0
    %1022 = vmatprep.subr.mxu0 0.0
    %1023 = vmatpush1.msra.mxu0 0.0
    %1024 = vmatprep.mubr.f32.mxu0 0.0
    %v1025 = vand.u32 %v131, 4294901760
    %1026 = vmatmul.mubr.f32.gmra.mrb[0].mxu0 %v1025
    %v1027 = vpop.f32.mrb[0].mxu0
    %v1028 = vadd.f32 %v877, %v1027
    %v1029 = vpop.f32.mrb[0].mxu0
    %1030 = vdwg.mxu0
    %1031 = vmatprep.subr.mxu0 0.0
    %v1032 = vand.u32 %v132, 4294901760
    %v1033 = vsub.f32 %v132, %v1032
    %1034 = vmatpush1.msra.mxu0 %v1033
    %1035 = vmatprep.subr.mxu0 0.0
    %v1036 = vand.u32 %v133, 4294901760
    %v1037 = vsub.f32 %v133, %v1036
    %1038 = vmatpush1.msra.mxu0 %v1037
    %1039 = vmatprep.subr.mxu0 0.0
    %v1040 = vand.u32 %v134, 4294901760
    %v1041 = vsub.f32 %v134, %v1040
    %1042 = vmatpush1.msra.mxu0 %v1041
    %1043 = vmatprep.subr.mxu0 0.0
    %v1044 = vand.u32 %v135, 4294901760
    %v1045 = vsub.f32 %v135, %v1044
    %1046 = vmatpush1.msra.mxu0 %v1045
    %1047 = vmatprep.subr.mxu0 0.0
    %v1048 = vand.u32 %v136, 4294901760
    %v1049 = vsub.f32 %v136, %v1048
    %1050 = vmatpush1.msra.mxu0 %v1049
    %1051 = vmatprep.subr.mxu0 0.0
    %v1052 = vand.u32 %v137, 4294901760
    %v1053 = vsub.f32 %v137, %v1052
    %1054 = vmatpush1.msra.mxu0 %v1053
    %1055 = vmatprep.subr.mxu0 0.0
    %v1056 = vand.u32 %v138, 4294901760
    %v1057 = vsub.f32 %v138, %v1056
    %1058 = vmatpush1.msra.mxu0 %v1057
    %1059 = vmatprep.subr.mxu0 0.0
    %v1060 = vand.u32 %v139, 4294901760
    %v1061 = vsub.f32 %v139, %v1060
    %1062 = vmatpush1.msra.mxu0 %v1061
    %1063 = vmatprep.subr.mxu0 0.0
    %v1064 = vand.u32 %v140, 4294901760
    %v1065 = vsub.f32 %v140, %v1064
    %1066 = vmatpush1.msra.mxu0 %v1065
    %1067 = vmatprep.subr.mxu0 0.0
    %v1068 = vand.u32 %v141, 4294901760
    %v1069 = vsub.f32 %v141, %v1068
    %1070 = vmatpush1.msra.mxu0 %v1069
    %1071 = vmatprep.subr.mxu0 0.0
    %v1072 = vand.u32 %v142, 4294901760
    %v1073 = vsub.f32 %v142, %v1072
    %1074 = vmatpush1.msra.mxu0 %v1073
    %1075 = vmatprep.subr.mxu0 0.0
    %v1076 = vand.u32 %v143, 4294901760
    %v1077 = vsub.f32 %v143, %v1076
    %1078 = vmatpush1.msra.mxu0 %v1077
    %1079 = vmatprep.subr.mxu0 0.0
    %v1080 = vand.u32 %v144, 4294901760
    %v1081 = vsub.f32 %v144, %v1080
    %1082 = vmatpush1.msra.mxu0 %v1081
    %1083 = vmatprep.subr.mxu0 0.0
    %v1084 = vand.u32 %v145, 4294901760
    %v1085 = vsub.f32 %v145, %v1084
    %1086 = vmatpush1.msra.mxu0 %v1085
    %1087 = vmatprep.subr.mxu0 0.0
    %v1088 = vand.u32 %v146, 4294901760
    %v1089 = vsub.f32 %v146, %v1088
    %1090 = vmatpush1.msra.mxu0 %v1089
    %1091 = vmatprep.subr.mxu0 0.0
    %v1092 = vand.u32 %v147, 4294901760
    %v1093 = vsub.f32 %v147, %v1092
    %1094 = vmatpush1.msra.mxu0 %v1093
    %1095 = vmatprep.subr.mxu0 0.0
    %1096 = vmatpush1.msra.mxu0 0.0
    %1097 = vmatprep.subr.mxu0 0.0
    %1098 = vmatpush1.msra.mxu0 0.0
    %1099 = vmatprep.subr.mxu0 0.0
    %1100 = vmatpush1.msra.mxu0 0.0
    %1101 = vmatprep.subr.mxu0 0.0
    %1102 = vmatpush1.msra.mxu0 0.0
    %1103 = vmatprep.subr.mxu0 0.0
    %1104 = vmatpush1.msra.mxu0 0.0
    %1105 = vmatprep.subr.mxu0 0.0
    %1106 = vmatpush1.msra.mxu0 0.0
    %1107 = vmatprep.subr.mxu0 0.0
    %1108 = vmatpush1.msra.mxu0 0.0
    %1109 = vmatprep.subr.mxu0 0.0
    %1110 = vmatpush1.msra.mxu0 0.0
    %1111 = vmatprep.subr.mxu0 0.0
    %1112 = vmatpush1.msra.mxu0 0.0
    %1113 = vmatprep.subr.mxu0 0.0
    %1114 = vmatpush1.msra.mxu0 0.0
    %1115 = vmatprep.subr.mxu0 0.0
    %1116 = vmatpush1.msra.mxu0 0.0
    %1117 = vmatprep.subr.mxu0 0.0
    %1118 = vmatpush1.msra.mxu0 0.0
    %1119 = vmatprep.subr.mxu0 0.0
    %1120 = vmatpush1.msra.mxu0 0.0
    %1121 = vmatprep.subr.mxu0 0.0
    %1122 = vmatpush1.msra.mxu0 0.0
    %1123 = vmatprep.subr.mxu0 0.0
    %1124 = vmatpush1.msra.mxu0 0.0
    %1125 = vmatprep.subr.mxu0 0.0
    %1126 = vmatpush1.msra.mxu0 0.0
    %1127 = vmatprep.mubr.f32.mxu0 0.0
    %v1128 = vand.u32 %v131, 4294901760
    %v1129 = vsub.f32 %v131, %v1128
    %1130 = vmatmul.mubr.f32.gmra.mrb[0].mxu0 %v1129
    %v1131 = vpop.f32.mrb[0].mxu0
    %v1132 = vadd.f32 %v1028, %v1131
    %v1133 = vpop.f32.mrb[0].mxu0
    %1134 = vdwg.mxu0
    %1135 = vmatprep.subr.mxu0 0.0
    %v1136 = vand.u32 %v132, 4294901760
    %1137 = vmatpush1.msra.mxu0 %v1136
    %1138 = vmatprep.subr.mxu0 0.0
    %v1139 = vand.u32 %v133, 4294901760
    %1140 = vmatpush1.msra.mxu0 %v1139
    %1141 = vmatprep.subr.mxu0 0.0
    %v1142 = vand.u32 %v134, 4294901760
    %1143 = vmatpush1.msra.mxu0 %v1142
    %1144 = vmatprep.subr.mxu0 0.0
    %v1145 = vand.u32 %v135, 4294901760
    %1146 = vmatpush1.msra.mxu0 %v1145
    %1147 = vmatprep.subr.mxu0 0.0
    %v1148 = vand.u32 %v136, 4294901760
    %1149 = vmatpush1.msra.mxu0 %v1148
    %1150 = vmatprep.subr.mxu0 0.0
    %v1151 = vand.u32 %v137, 4294901760
    %1152 = vmatpush1.msra.mxu0 %v1151
    %1153 = vmatprep.subr.mxu0 0.0
    %v1154 = vand.u32 %v138, 4294901760
    %1155 = vmatpush1.msra.mxu0 %v1154
    %1156 = vmatprep.subr.mxu0 0.0
    %v1157 = vand.u32 %v139, 4294901760
    %1158 = vmatpush1.msra.mxu0 %v1157
    %1159 = vmatprep.subr.mxu0 0.0
    %v1160 = vand.u32 %v140, 4294901760
    %1161 = vmatpush1.msra.mxu0 %v1160
    %1162 = vmatprep.subr.mxu0 0.0
    %v1163 = vand.u32 %v141, 4294901760
    %1164 = vmatpush1.msra.mxu0 %v1163
    %1165 = vmatprep.subr.mxu0 0.0
    %v1166 = vand.u32 %v142, 4294901760
    %1167 = vmatpush1.msra.mxu0 %v1166
    %1168 = vmatprep.subr.mxu0 0.0
    %v1169 = vand.u32 %v143, 4294901760
    %1170 = vmatpush1.msra.mxu0 %v1169
    %1171 = vmatprep.subr.mxu0 0.0
    %v1172 = vand.u32 %v144, 4294901760
    %1173 = vmatpush1.msra.mxu0 %v1172
    %1174 = vmatprep.subr.mxu0 0.0
    %v1175 = vand.u32 %v145, 4294901760
    %1176 = vmatpush1.msra.mxu0 %v1175
    %1177 = vmatprep.subr.mxu0 0.0
    %v1178 = vand.u32 %v146, 4294901760
    %1179 = vmatpush1.msra.mxu0 %v1178
    %1180 = vmatprep.subr.mxu0 0.0
    %v1181 = vand.u32 %v147, 4294901760
    %1182 = vmatpush1.msra.mxu0 %v1181
    %1183 = vmatprep.subr.mxu0 0.0
    %1184 = vmatpush1.msra.mxu0 0.0
    %1185 = vmatprep.subr.mxu0 0.0
    %1186 = vmatpush1.msra.mxu0 0.0
    %1187 = vmatprep.subr.mxu0 0.0
    %1188 = vmatpush1.msra.mxu0 0.0
    %1189 = vmatprep.subr.mxu0 0.0
    %1190 = vmatpush1.msra.mxu0 0.0
    %1191 = vmatprep.subr.mxu0 0.0
    %1192 = vmatpush1.msra.mxu0 0.0
    %1193 = vmatprep.subr.mxu0 0.0
    %1194 = vmatpush1.msra.mxu0 0.0
    %1195 = vmatprep.subr.mxu0 0.0
    %1196 = vmatpush1.msra.mxu0 0.0
    %1197 = vmatprep.subr.mxu0 0.0
    %1198 = vmatpush1.msra.mxu0 0.0
    %1199 = vmatprep.subr.mxu0 0.0
    %1200 = vmatpush1.msra.mxu0 0.0
    %1201 = vmatprep.subr.mxu0 0.0
    %1202 = vmatpush1.msra.mxu0 0.0
    %1203 = vmatprep.subr.mxu0 0.0
    %1204 = vmatpush1.msra.mxu0 0.0
    %1205 = vmatprep.subr.mxu0 0.0
    %1206 = vmatpush1.msra.mxu0 0.0
    %1207 = vmatprep.subr.mxu0 0.0
    %1208 = vmatpush1.msra.mxu0 0.0
    %1209 = vmatprep.subr.mxu0 0.0
    %1210 = vmatpush1.msra.mxu0 0.0
    %1211 = vmatprep.subr.mxu0 0.0
    %1212 = vmatpush1.msra.mxu0 0.0
    %1213 = vmatprep.subr.mxu0 0.0
    %1214 = vmatpush1.msra.mxu0 0.0
    %1215 = vmatprep.mubr.f32.mxu0 0.0
    %v1216 = vand.u32 %v131, 4294901760
    %v1217 = vsub.f32 %v131, %v1216
    %v1218 = vand.u32 %v1217, 4294901760
    %1219 = vmatmul.mubr.f32.gmra.mrb[0].mxu0 %v1218
    %v1220 = vpop.f32.mrb[0].mxu0
    %v1221 = vadd.f32 %v1132, %v1220
    %v1222 = vpop.f32.mrb[0].mxu0
    %1223 = vdwg.mxu0
    %1224 = vmatprep.subr.mxu0 0.0
    %v1225 = vand.u32 %v132, 4294901760
    %v1226 = vsub.f32 %v132, %v1225
    %v1227 = vand.u32 %v1226, 4294901760
    %1228 = vmatpush1.msra.mxu0 %v1227
    %1229 = vmatprep.subr.mxu0 0.0
    %v1230 = vand.u32 %v133, 4294901760
    %v1231 = vsub.f32 %v133, %v1230
    %v1232 = vand.u32 %v1231, 4294901760
    %1233 = vmatpush1.msra.mxu0 %v1232
    %1234 = vmatprep.subr.mxu0 0.0
    %v1235 = vand.u32 %v134, 4294901760
    %v1236 = vsub.f32 %v134, %v1235
    %v1237 = vand.u32 %v1236, 4294901760
    %1238 = vmatpush1.msra.mxu0 %v1237
    %1239 = vmatprep.subr.mxu0 0.0
    %v1240 = vand.u32 %v135, 4294901760
    %v1241 = vsub.f32 %v135, %v1240
    %v1242 = vand.u32 %v1241, 4294901760
    %1243 = vmatpush1.msra.mxu0 %v1242
    %1244 = vmatprep.subr.mxu0 0.0
    %v1245 = vand.u32 %v136, 4294901760
    %v1246 = vsub.f32 %v136, %v1245
    %v1247 = vand.u32 %v1246, 4294901760
    %1248 = vmatpush1.msra.mxu0 %v1247
    %1249 = vmatprep.subr.mxu0 0.0
    %v1250 = vand.u32 %v137, 4294901760
    %v1251 = vsub.f32 %v137, %v1250
    %v1252 = vand.u32 %v1251, 4294901760
    %1253 = vmatpush1.msra.mxu0 %v1252
    %1254 = vmatprep.subr.mxu0 0.0
    %v1255 = vand.u32 %v138, 4294901760
    %v1256 = vsub.f32 %v138, %v1255
    %v1257 = vand.u32 %v1256, 4294901760
    %1258 = vmatpush1.msra.mxu0 %v1257
    %1259 = vmatprep.subr.mxu0 0.0
    %v1260 = vand.u32 %v139, 4294901760
    %v1261 = vsub.f32 %v139, %v1260
    %v1262 = vand.u32 %v1261, 4294901760
    %1263 = vmatpush1.msra.mxu0 %v1262
    %1264 = vmatprep.subr.mxu0 0.0
    %v1265 = vand.u32 %v140, 4294901760
    %v1266 = vsub.f32 %v140, %v1265
    %v1267 = vand.u32 %v1266, 4294901760
    %1268 = vmatpush1.msra.mxu0 %v1267
    %1269 = vmatprep.subr.mxu0 0.0
    %v1270 = vand.u32 %v141, 4294901760
    %v1271 = vsub.f32 %v141, %v1270
    %v1272 = vand.u32 %v1271, 4294901760
    %1273 = vmatpush1.msra.mxu0 %v1272
    %1274 = vmatprep.subr.mxu0 0.0
    %v1275 = vand.u32 %v142, 4294901760
    %v1276 = vsub.f32 %v142, %v1275
    %v1277 = vand.u32 %v1276, 4294901760
    %1278 = vmatpush1.msra.mxu0 %v1277
    %1279 = vmatprep.subr.mxu0 0.0
    %v1280 = vand.u32 %v143, 4294901760
    %v1281 = vsub.f32 %v143, %v1280
    %v1282 = vand.u32 %v1281, 4294901760
    %1283 = vmatpush1.msra.mxu0 %v1282
    %1284 = vmatprep.subr.mxu0 0.0
    %v1285 = vand.u32 %v144, 4294901760
    %v1286 = vsub.f32 %v144, %v1285
    %v1287 = vand.u32 %v1286, 4294901760
    %1288 = vmatpush1.msra.mxu0 %v1287
    %1289 = vmatprep.subr.mxu0 0.0
    %v1290 = vand.u32 %v145, 4294901760
    %v1291 = vsub.f32 %v145, %v1290
    %v1292 = vand.u32 %v1291, 4294901760
    %1293 = vmatpush1.msra.mxu0 %v1292
    %1294 = vmatprep.subr.mxu0 0.0
    %v1295 = vand.u32 %v146, 4294901760
    %v1296 = vsub.f32 %v146, %v1295
    %v1297 = vand.u32 %v1296, 4294901760
    %1298 = vmatpush1.msra.mxu0 %v1297
    %1299 = vmatprep.subr.mxu0 0.0
    %v1300 = vand.u32 %v147, 4294901760
    %v1301 = vsub.f32 %v147, %v1300
    %v1302 = vand.u32 %v1301, 4294901760
    %1303 = vmatpush1.msra.mxu0 %v1302
    %1304 = vmatprep.subr.mxu0 0.0
    %1305 = vmatpush1.msra.mxu0 0.0
    %1306 = vmatprep.subr.mxu0 0.0
    %1307 = vmatpush1.msra.mxu0 0.0
    %1308 = vmatprep.subr.mxu0 0.0
    %1309 = vmatpush1.msra.mxu0 0.0
    %1310 = vmatprep.subr.mxu0 0.0
    %1311 = vmatpush1.msra.mxu0 0.0
    %1312 = vmatprep.subr.mxu0 0.0
    %1313 = vmatpush1.msra.mxu0 0.0
    %1314 = vmatprep.subr.mxu0 0.0
    %1315 = vmatpush1.msra.mxu0 0.0
    %1316 = vmatprep.subr.mxu0 0.0
    %1317 = vmatpush1.msra.mxu0 0.0
    %1318 = vmatprep.subr.mxu0 0.0
    %1319 = vmatpush1.msra.mxu0 0.0
    %1320 = vmatprep.subr.mxu0 0.0
    %1321 = vmatpush1.msra.mxu0 0.0
    %1322 = vmatprep.subr.mxu0 0.0
    %1323 = vmatpush1.msra.mxu0 0.0
    %1324 = vmatprep.subr.mxu0 0.0
    %1325 = vmatpush1.msra.mxu0 0.0
    %1326 = vmatprep.subr.mxu0 0.0
    %1327 = vmatpush1.msra.mxu0 0.0
    %1328 = vmatprep.subr.mxu0 0.0
    %1329 = vmatpush1.msra.mxu0 0.0
    %1330 = vmatprep.subr.mxu0 0.0
    %1331 = vmatpush1.msra.mxu0 0.0
    %1332 = vmatprep.subr.mxu0 0.0
    %1333 = vmatpush1.msra.mxu0 0.0
    %1334 = vmatprep.subr.mxu0 0.0
    %1335 = vmatpush1.msra.mxu0 0.0
    %1336 = vmatprep.mubr.f32.mxu0 0.0
    %v1337 = vand.u32 %v131, 4294901760
    %1338 = vmatmul.mubr.f32.gmra.mrb[0].mxu0 %v1337
    %v1339 = vpop.f32.mrb[0].mxu0
    %v1340 = vadd.f32 %v1221, %v1339
    %v1341 = vpop.f32.mrb[0].mxu0
    %1342 = vdwg.mxu0
    %1343 = vmatprep.subr.mxu0 0.0
    %v1344 = vand.u32 %v132, 4294901760
    %1345 = vmatpush1.msra.mxu0 %v1344
    %1346 = vmatprep.subr.mxu0 0.0
    %v1347 = vand.u32 %v133, 4294901760
    %1348 = vmatpush1.msra.mxu0 %v1347
    %1349 = vmatprep.subr.mxu0 0.0
    %v1350 = vand.u32 %v134, 4294901760
    %1351 = vmatpush1.msra.mxu0 %v1350
    %1352 = vmatprep.subr.mxu0 0.0
    %v1353 = vand.u32 %v135, 4294901760
    %1354 = vmatpush1.msra.mxu0 %v1353
    %1355 = vmatprep.subr.mxu0 0.0
    %v1356 = vand.u32 %v136, 4294901760
    %1357 = vmatpush1.msra.mxu0 %v1356
    %1358 = vmatprep.subr.mxu0 0.0
    %v1359 = vand.u32 %v137, 4294901760
    %1360 = vmatpush1.msra.mxu0 %v1359
    %1361 = vmatprep.subr.mxu0 0.0
    %v1362 = vand.u32 %v138, 4294901760
    %1363 = vmatpush1.msra.mxu0 %v1362
    %1364 = vmatprep.subr.mxu0 0.0
    %v1365 = vand.u32 %v139, 4294901760
    %1366 = vmatpush1.msra.mxu0 %v1365
    %1367 = vmatprep.subr.mxu0 0.0
    %v1368 = vand.u32 %v140, 4294901760
    %1369 = vmatpush1.msra.mxu0 %v1368
    %1370 = vmatprep.subr.mxu0 0.0
    %v1371 = vand.u32 %v141, 4294901760
    %1372 = vmatpush1.msra.mxu0 %v1371
    %1373 = vmatprep.subr.mxu0 0.0
    %v1374 = vand.u32 %v142, 4294901760
    %1375 = vmatpush1.msra.mxu0 %v1374
    %1376 = vmatprep.subr.mxu0 0.0
    %v1377 = vand.u32 %v143, 4294901760
    %1378 = vmatpush1.msra.mxu0 %v1377
    %1379 = vmatprep.subr.mxu0 0.0
    %v1380 = vand.u32 %v144, 4294901760
    %1381 = vmatpush1.msra.mxu0 %v1380
    %1382 = vmatprep.subr.mxu0 0.0
    %v1383 = vand.u32 %v145, 4294901760
    %1384 = vmatpush1.msra.mxu0 %v1383
    %1385 = vmatprep.subr.mxu0 0.0
    %v1386 = vand.u32 %v146, 4294901760
    %1387 = vmatpush1.msra.mxu0 %v1386
    %1388 = vmatprep.subr.mxu0 0.0
    %v1389 = vand.u32 %v147, 4294901760
    %1390 = vmatpush1.msra.mxu0 %v1389
    %1391 = vmatprep.subr.mxu0 0.0
    %1392 = vmatpush1.msra.mxu0 0.0
    %1393 = vmatprep.subr.mxu0 0.0
    %1394 = vmatpush1.msra.mxu0 0.0
    %1395 = vmatprep.subr.mxu0 0.0
    %1396 = vmatpush1.msra.mxu0 0.0
    %1397 = vmatprep.subr.mxu0 0.0
    %1398 = vmatpush1.msra.mxu0 0.0
    %1399 = vmatprep.subr.mxu0 0.0
    %1400 = vmatpush1.msra.mxu0 0.0
    %1401 = vmatprep.subr.mxu0 0.0
    %1402 = vmatpush1.msra.mxu0 0.0
    %1403 = vmatprep.subr.mxu0 0.0
    %1404 = vmatpush1.msra.mxu0 0.0
    %1405 = vmatprep.subr.mxu0 0.0
    %1406 = vmatpush1.msra.mxu0 0.0
    %1407 = vmatprep.subr.mxu0 0.0
    %1408 = vmatpush1.msra.mxu0 0.0
    %1409 = vmatprep.subr.mxu0 0.0
    %1410 = vmatpush1.msra.mxu0 0.0
    %1411 = vmatprep.subr.mxu0 0.0
    %1412 = vmatpush1.msra.mxu0 0.0
    %1413 = vmatprep.subr.mxu0 0.0
    %1414 = vmatpush1.msra.mxu0 0.0
    %1415 = vmatprep.subr.mxu0 0.0
    %1416 = vmatpush1.msra.mxu0 0.0
    %1417 = vmatprep.subr.mxu0 0.0
    %1418 = vmatpush1.msra.mxu0 0.0
    %1419 = vmatprep.subr.mxu0 0.0
    %1420 = vmatpush1.msra.mxu0 0.0
    %1421 = vmatprep.subr.mxu0 0.0
    %1422 = vmatpush1.msra.mxu0 0.0
    %1423 = vmatprep.mubr.f32.mxu0 0.0
    %v1424 = vand.u32 %v131, 4294901760
    %1425 = vmatmul.mubr.f32.gmra.mrb[0].mxu0 %v1424
    %v1426 = vpop.f32.mrb[0].mxu0
    %v1427 = vadd.f32 %v1340, %v1426
    %v1428 = vpop.f32.mrb[0].mxu0
    %1429 = vdwg.mxu0
    %v1430 = vrsqrt.pop %v786
    %v1431 = vmul.f32 %v786, %v1430
    %vm1432 = vcmp.eq.f32.partialorder %v786, inf
    %v1433 = vsel %vm1432, %v786, %v1431
    %vm1434 = vcmp.eq.f32.partialorder %v786, 0.0
    %v1435 = vand.u32 %v786, 2147483648
    %v1436 = vsel %vm1434, %v1435, %v1433
    %v1437 = vrsqrt.pop %v1427
    %v1438 = vmul.f32 %v1427, %v1437
    %vm1439 = vcmp.eq.f32.partialorder %v1427, inf
    %v1440 = vsel %vm1439, %v1427, %v1438
    %vm1441 = vcmp.eq.f32.partialorder %v1427, 0.0
    %v1442 = vand.u32 %v1427, 2147483648
    %v1443 = vsel %vm1441, %v1442, %v1440
    %v1444 = vstv %s121
    %v1445 = vsub.f32 %v1436, %v1444
    %v1446 = vmax.f32 %v1445, 0.0
    %v1447 = vstv %s122
    %v1448 = vsub.f32 %v1447, %v1443
    %v1449 = vmax.f32 %v1448, 0.0
    %v1450 = vadd.f32 %v1446, %v1449
    %v1451 = vld [vmem:[#allocation2] sm:$0x1]
    %vm1452 = vcmask 31744
    %v1453 = vsel %vm1452, %v1450, 0.0
    %v1454 = vrot.slane %v1453, 4
    %v1455 = vadd.f32 %v1453, %v1454
    %v1456 = vrot.slane %v1455, 2
    %v1457 = vadd.f32 %v1455, %v1456
    %v1458 = vrot.slane %v1457, 1
    %v1459 = vadd.f32 %v1457, %v1458
    %v1460 = vadd.f32 %v1451, %v1459
    %vm1461 = vcmask 24576
    %1462 = vst.msk [vmem:[#allocation2] sm:$0x1] %vm1461, %v1460
    // Predicated region
    $region30: #{tpu_custom_call.1} parent=1 // pred_check
      %p1463 = pneg %p115
    $region31: #{tpu_custom_call.1} parent=1 // pred_check_branch
      %1465 = sbr.rel (%p1463) target = $region33
    $region32: #{tpu_custom_call.1} parent=1 // pred_region
      %v1466 = vld [vmem:[#allocation2] sm:$0x1]
      %v1467 = vsel %vm1461, %v1466, 0.0
      %1468 = vadd.xlane.f32.xlu0 %v1467
      %v1469 = vpop.xlane.xlu0 %1468
      %v1470 = vrot.slane %v1469, 4
      %v1471 = vadd.f32 %v1469, %v1470
      %v1472 = vrot.slane %v1471, 2
      %v1473 = vadd.f32 %v1471, %v1472
      %v1474 = vrot.slane %v1473, 1
      %v1475 = vadd.f32 %v1473, %v1474
      %s1476 = vtos %v1475
      %v1477 = vstv %s1476
      %1478 = vst [vmem:[#allocation6] sm:$0xff] %v1477
    $region33: #{tpu_custom_call.1} parent=1 // pred_fallthru
      _
    // Predicated region
    $region34: #{tpu_custom_call.1} parent=1 // pred_check
      _
    $region35: #{tpu_custom_call.1} parent=1 // pred_check_branch
      %1480 = sbr.rel (0) target = $region37
    $region36: #{tpu_custom_call.1} parent=1 // pred_region
      %s1482 = ssub.s32 128, 128
      %1483 = vsyncadd [#allocation4], %s1482
      %s1485 = sshll.u32 [#allocation6], 4
      %s1486 = int_to_ptr.vmem [resolvable:$true] %s1485
      %1488 = dma.vmem_to_hbm [thread:$0]  %s1486, 128, %s5, [#allocation4]
    $region37: #{tpu_custom_call.1} parent=1 // pred_fallthru
      _
    // Predicated region
    $region38: #{tpu_custom_call.1} parent=1 // pred_check
      _
    $region39: #{tpu_custom_call.1} parent=1 // pred_check_branch
      %1490 = sbr.rel (0) target = $region41
    $region40: #{tpu_custom_call.1} parent=1 // pred_region
      %1491 = dma.done [#allocation4], 128
    $region41: #{tpu_custom_call.1} parent=1 // pred_fallthru
      _
    %1492 = vsyncpa [#allocation4], 1
    %1493 = vsyncpa [#allocation5], 1

</llo_original>
